<compile_context>
chip_gen: v7x
topology: tpu7x:2x2x1
jax: 0.10.0
libtpu: 0.0.40
codegen_flags: <defaults>
</compile_context>

<pallas_src>
import functools
import math

import jax
import jax.numpy as jnp
from jax import lax
from jax.experimental import pallas as pl
from jax.experimental.pallas import tpu as pltpu


def _mha_kernel(xs_ref, w_in_ref, w_out_ref, b_ref, o_ref, *,
                num_heads, batch, seq_len):
    """Single-invocation MHA forward.

    xs_ref:    (3, B*L, E)   stacked q/k/v activations (row-flattened batch)
    w_in_ref:  (3, E, E)     stacked Wq (pre-scaled), Wk, Wv
    w_out_ref: (H, Dh, E)    head-major out-projection weight
    b_ref:     (4, 1, E)     stacked bq (pre-scaled), bk, bv, bo
    o_ref:     (B, L, E)     output
    """
    L = seq_len
    E = w_in_ref.shape[1]
    Dh = E // num_heads

    # Fused input projections: three wide MXU matmuls with M = B*L.
    qp = jnp.dot(xs_ref[0], w_in_ref[0], preferred_element_type=jnp.float32) + b_ref[0]
    kp = jnp.dot(xs_ref[1], w_in_ref[1], preferred_element_type=jnp.float32) + b_ref[1]
    vp = jnp.dot(xs_ref[2], w_in_ref[2], preferred_element_type=jnp.float32) + b_ref[2]

    bo = b_ref[3]                                     # (1, E)

    # Per-(batch, head) attention on static slices of the projected
    # activations.  B*H = 8 unrolled iterations at this size — fine; see the
    # file-level TODO for larger H / L.
    for b in range(batch):
        r0 = b * L
        qb = qp[r0:r0 + L]                            # (L, E)
        kb = kp[r0:r0 + L]
        vb = vp[r0:r0 + L]

        acc = jnp.zeros((L, E), jnp.float32)
        for h in range(num_heads):
            c0 = h * Dh
            qh = qb[:, c0:c0 + Dh]                    # (L, Dh) static lane slice
            kh = kb[:, c0:c0 + Dh]
            vh = vb[:, c0:c0 + Dh]

            # Scores: contract last dims -> q_h @ k_h^T with the transpose
            # folded into the MXU op.  1/sqrt(Dh) already folded into Wq/bq.
            s = lax.dot_general(qh, kh, (((1,), (1,)), ((), ())),
                                preferred_element_type=jnp.float32)   # (L, L)

            # Numerically-stable, *exact* softmax (no approx reciprocal).
            s = s - jnp.max(s, axis=-1, keepdims=True)
            p = jnp.exp(s)
            p = p / jnp.sum(p, axis=-1, keepdims=True)

            oh = jnp.dot(p, vh, preferred_element_type=jnp.float32)   # (L, Dh)

            # Accumulate through this head's row block of Wo (no head concat).
            acc = acc + jnp.dot(oh, w_out_ref[h],
                                preferred_element_type=jnp.float32)   # (L, E)

        o_ref[b] = (acc + bo).astype(o_ref.dtype)


def prepare_params(params, num_heads):
    """One-time parameter packing / re-layout (outside the hot path).

    params hold the projection weights pre-transposed as (E, E) so the math is
    x @ W + b (i.e. W = torch weight .T), and biases as (1, E).
    """
    E = params["wq"].shape[0]
    assert E % num_heads == 0
    head_dim = E // num_heads
    scale = 1.0 / math.sqrt(head_dim)

    w_in = jnp.stack([params["wq"] * scale, params["wk"], params["wv"]])   # (3, E, E)
    w_out = params["wo"].reshape(num_heads, head_dim, E)                   # (H, Dh, E)
    b_all = jnp.stack([params["bq"] * scale, params["bk"],
                       params["bv"], params["bo"]])                        # (4, 1, E)
    return w_in, w_out, b_all


@functools.partial(jax.jit, static_argnames=("num_heads",))
def multihead_attention(q, k, v, w_in, w_out, b_all, *, num_heads):
    """q, k, v: (B, L, E) float32; packed params from prepare_params()."""
    B, L, E = q.shape

    # Stack the three activation streams into a single operand (one DMA).
    xs = jnp.stack([q.reshape(B * L, E),
                    k.reshape(B * L, E),
                    v.reshape(B * L, E)])                                  # (3, B*L, E)

    kernel = functools.partial(_mha_kernel, num_heads=num_heads,
                               batch=B, seq_len=L)

    vmem = pltpu.MemorySpace.VMEM
    return pl.pallas_call(
        kernel,
        out_shape=jax.ShapeDtypeStruct((B, L, E), q.dtype),
        in_specs=[
            pl.BlockSpec(memory_space=vmem),    # xs
            pl.BlockSpec(memory_space=vmem),    # w_in
            pl.BlockSpec(memory_space=vmem),    # w_out
            pl.BlockSpec(memory_space=vmem),    # biases
        ],
        out_specs=pl.BlockSpec(memory_space=vmem),
    )(xs, w_in, w_out, b_all)


def _reference(q, k, v, params, *, num_heads, precision):
    """Pure-JAX reference of torch.nn.MultiheadAttention forward."""
    B, L, E = q.shape
    Dh = E // num_heads
    qp = jnp.einsum("ble,ef->blf", q, params["wq"], precision=precision) + params["bq"]
    kp = jnp.einsum("ble,ef->blf", k, params["wk"], precision=precision) + params["bk"]
    vp = jnp.einsum("ble,ef->blf", v, params["wv"], precision=precision) + params["bv"]

    def split(x):  # (B, L, E) -> (B, H, L, Dh)
        return x.reshape(B, L, num_heads, Dh).transpose(0, 2, 1, 3)

    qh, kh, vh = split(qp), split(kp), split(vp)
    s = jnp.einsum("bhqd,bhkd->bhqk", qh, kh, precision=precision) / math.sqrt(Dh)
    p = jax.nn.softmax(s, axis=-1)
    o = jnp.einsum("bhqk,bhkd->bhqd", p, vh, precision=precision)
    o = o.transpose(0, 2, 1, 3).reshape(B, L, E)
    return jnp.einsum("ble,ef->blf", o, params["wo"], precision=precision) + params["bo"]


if __name__ == "__main__":
    B, L, E = 2, 10, 64
    NUM_HEADS = 4

    key = jax.random.PRNGKey(0)
    kq, kk, kv, kwq, kwk, kwv, kwo, kbq, kbk, kbv, kbo = jax.random.split(key, 11)

    q = jax.random.normal(kq, (B, L, E), dtype=jnp.float32)
    k = jax.random.normal(kk, (B, L, E), dtype=jnp.float32)
    v = jax.random.normal(kv, (B, L, E), dtype=jnp.float32)

    # Deterministic synthetic parameters with the shapes of
    # nn.MultiheadAttention's in_proj (split into Wq/Wk/Wv) and out_proj,
    # stored pre-transposed as (E, E) so the math is x @ W + b.
    w_scale = 1.0 / math.sqrt(E)
    params = {
        "wq": jax.random.normal(kwq, (E, E), dtype=jnp.float32) * w_scale,
        "wk": jax.random.normal(kwk, (E, E), dtype=jnp.float32) * w_scale,
        "wv": jax.random.normal(kwv, (E, E), dtype=jnp.float32) * w_scale,
        "wo": jax.random.normal(kwo, (E, E), dtype=jnp.float32) * w_scale,
        "bq": jax.random.normal(kbq, (1, E), dtype=jnp.float32) * 0.02,
        "bk": jax.random.normal(kbk, (1, E), dtype=jnp.float32) * 0.02,
        "bv": jax.random.normal(kbv, (1, E), dtype=jnp.float32) * 0.02,
        "bo": jax.random.normal(kbo, (1, E), dtype=jnp.float32) * 0.02,
    }

    # One-time parameter packing (hoisted out of the hot path).
    w_in, w_out, b_all = prepare_params(params, NUM_HEADS)

    out = multihead_attention(q, k, v, w_in, w_out, b_all, num_heads=NUM_HEADS)
    out = jax.block_until_ready(out)
    assert out.shape == (B, L, E)

    # The kernel's f32 matmuls run at full f32 precision when compiled by
    # Mosaic, but at XLA's default (bf16-pass) precision in interpret mode.
    # Compare against the reference computed both ways and require tight
    # agreement with the matching one.
    ref_hi = _reference(q, k, v, params, num_heads=NUM_HEADS,
                        precision=lax.Precision.HIGHEST)
    ref_lo = _reference(q, k, v, params, num_heads=NUM_HEADS,
                        precision=lax.Precision.DEFAULT)
    err_hi = float(jnp.max(jnp.abs(out - ref_hi)))
    err_lo = float(jnp.max(jnp.abs(out - ref_lo)))
    assert min(err_hi, err_lo) < 1e-3, ("mismatch vs reference", err_hi, err_lo)

    print("KERNEL_OK")
</pallas_src>

<mosaic_0001>
module attributes {stable_mosaic.version = 11 : i64} {
  func.func @_mha_kernel(%arg0: memref<3x20x64xf32, #tpu.memory_space<vmem>>, %arg1: memref<3x64x64xf32, #tpu.memory_space<vmem>>, %arg2: memref<4x16x64xf32, #tpu.memory_space<vmem>>, %arg3: memref<4x1x64xf32, #tpu.memory_space<vmem>>, %arg4: memref<2x10x64xf32, #tpu.memory_space<vmem>>) attributes {dimension_semantics = [], scalar_prefetch = 0 : i64, scratch_operands = 0 : i64, tpu.core_type = #tpu.core_type<tc>} {
    %c0 = arith.constant 0 : index
    %c0_0 = arith.constant 0 : index
    %c0_1 = arith.constant 0 : index
    %0 = vector.load %arg0[%c0, %c0_0, %c0_1] : memref<3x20x64xf32, #tpu.memory_space<vmem>>, vector<1x20x64xf32>
    %1 = vector.shape_cast %0 : vector<1x20x64xf32> to vector<20x64xf32>
    %c0_2 = arith.constant 0 : index
    %c0_3 = arith.constant 0 : index
    %c0_4 = arith.constant 0 : index
    %2 = vector.load %arg1[%c0_2, %c0_3, %c0_4] : memref<3x64x64xf32, #tpu.memory_space<vmem>>, vector<1x64x64xf32>
    %3 = vector.shape_cast %2 : vector<1x64x64xf32> to vector<64x64xf32>
    %cst = arith.constant dense<0.000000e+00> : vector<20x64xf32>
    %4 = tpu.matmul %1, %3, %cst {dimension_numbers = #tpu.dot_dimension_numbers<[1], [0], [0], [1], [0, 0, 1, 1], [], []>} : vector<20x64xf32>, vector<64x64xf32>, vector<20x64xf32> -> vector<20x64xf32>
    %c0_5 = arith.constant 0 : index
    %c0_6 = arith.constant 0 : index
    %c0_7 = arith.constant 0 : index
    %5 = vector.load %arg3[%c0_5, %c0_6, %c0_7] : memref<4x1x64xf32, #tpu.memory_space<vmem>>, vector<1x1x64xf32>
    %6 = vector.shape_cast %5 : vector<1x1x64xf32> to vector<1x64xf32>
    %7 = vector.broadcast %6 : vector<1x64xf32> to vector<20x64xf32>
    %8 = arith.addf %4, %7 : vector<20x64xf32>
    %c1 = arith.constant 1 : index
    %c0_8 = arith.constant 0 : index
    %c0_9 = arith.constant 0 : index
    %9 = vector.load %arg0[%c1, %c0_8, %c0_9] : memref<3x20x64xf32, #tpu.memory_space<vmem>>, vector<1x20x64xf32>
    %10 = vector.shape_cast %9 : vector<1x20x64xf32> to vector<20x64xf32>
    %c1_10 = arith.constant 1 : index
    %c0_11 = arith.constant 0 : index
    %c0_12 = arith.constant 0 : index
    %11 = vector.load %arg1[%c1_10, %c0_11, %c0_12] : memref<3x64x64xf32, #tpu.memory_space<vmem>>, vector<1x64x64xf32>
    %12 = vector.shape_cast %11 : vector<1x64x64xf32> to vector<64x64xf32>
    %cst_13 = arith.constant dense<0.000000e+00> : vector<20x64xf32>
    %13 = tpu.matmul %10, %12, %cst_13 {dimension_numbers = #tpu.dot_dimension_numbers<[1], [0], [0], [1], [0, 0, 1, 1], [], []>} : vector<20x64xf32>, vector<64x64xf32>, vector<20x64xf32> -> vector<20x64xf32>
    %c1_14 = arith.constant 1 : index
    %c0_15 = arith.constant 0 : index
    %c0_16 = arith.constant 0 : index
    %14 = vector.load %arg3[%c1_14, %c0_15, %c0_16] : memref<4x1x64xf32, #tpu.memory_space<vmem>>, vector<1x1x64xf32>
    %15 = vector.shape_cast %14 : vector<1x1x64xf32> to vector<1x64xf32>
    %16 = vector.broadcast %15 : vector<1x64xf32> to vector<20x64xf32>
    %17 = arith.addf %13, %16 : vector<20x64xf32>
    %c2 = arith.constant 2 : index
    %c0_17 = arith.constant 0 : index
    %c0_18 = arith.constant 0 : index
    %18 = vector.load %arg0[%c2, %c0_17, %c0_18] : memref<3x20x64xf32, #tpu.memory_space<vmem>>, vector<1x20x64xf32>
    %19 = vector.shape_cast %18 : vector<1x20x64xf32> to vector<20x64xf32>
    %c2_19 = arith.constant 2 : index
    %c0_20 = arith.constant 0 : index
    %c0_21 = arith.constant 0 : index
    %20 = vector.load %arg1[%c2_19, %c0_20, %c0_21] : memref<3x64x64xf32, #tpu.memory_space<vmem>>, vector<1x64x64xf32>
    %21 = vector.shape_cast %20 : vector<1x64x64xf32> to vector<64x64xf32>
    %cst_22 = arith.constant dense<0.000000e+00> : vector<20x64xf32>
    %22 = tpu.matmul %19, %21, %cst_22 {dimension_numbers = #tpu.dot_dimension_numbers<[1], [0], [0], [1], [0, 0, 1, 1], [], []>} : vector<20x64xf32>, vector<64x64xf32>, vector<20x64xf32> -> vector<20x64xf32>
    %c2_23 = arith.constant 2 : index
    %c0_24 = arith.constant 0 : index
    %c0_25 = arith.constant 0 : index
    %23 = vector.load %arg3[%c2_23, %c0_24, %c0_25] : memref<4x1x64xf32, #tpu.memory_space<vmem>>, vector<1x1x64xf32>
    %24 = vector.shape_cast %23 : vector<1x1x64xf32> to vector<1x64xf32>
    %25 = vector.broadcast %24 : vector<1x64xf32> to vector<20x64xf32>
    %26 = arith.addf %22, %25 : vector<20x64xf32>
    %c3 = arith.constant 3 : index
    %c0_26 = arith.constant 0 : index
    %c0_27 = arith.constant 0 : index
    %27 = vector.load %arg3[%c3, %c0_26, %c0_27] : memref<4x1x64xf32, #tpu.memory_space<vmem>>, vector<1x1x64xf32>
    %28 = vector.shape_cast %27 : vector<1x1x64xf32> to vector<1x64xf32>
    %29 = vector.extract_strided_slice %8 {offsets = [0, 0], sizes = [10, 64], strides = [1, 1]} : vector<20x64xf32> to vector<10x64xf32>
    %30 = vector.extract_strided_slice %17 {offsets = [0, 0], sizes = [10, 64], strides = [1, 1]} : vector<20x64xf32> to vector<10x64xf32>
    %31 = vector.extract_strided_slice %26 {offsets = [0, 0], sizes = [10, 64], strides = [1, 1]} : vector<20x64xf32> to vector<10x64xf32>
    %cst_28 = arith.constant 0.000000e+00 : f32
    %32 = vector.broadcast %cst_28 : f32 to vector<10x64xf32>
    %33 = vector.extract_strided_slice %29 {offsets = [0, 0], sizes = [10, 16], strides = [1, 1]} : vector<10x64xf32> to vector<10x16xf32>
    %34 = vector.extract_strided_slice %30 {offsets = [0, 0], sizes = [10, 16], strides = [1, 1]} : vector<10x64xf32> to vector<10x16xf32>
    %35 = vector.extract_strided_slice %31 {offsets = [0, 0], sizes = [10, 16], strides = [1, 1]} : vector<10x64xf32> to vector<10x16xf32>
    %cst_29 = arith.constant dense<0.000000e+00> : vector<10x10xf32>
    %36 = tpu.matmul %33, %34, %cst_29 {dimension_numbers = #tpu.dot_dimension_numbers<[1], [1], [0], [0], [0, 0, 1, 0], [], []>} : vector<10x16xf32>, vector<10x16xf32>, vector<10x10xf32> -> vector<10x10xf32>
    %cst_30 = arith.constant dense<0xFF800000> : vector<10xf32>
    %37 = vector.multi_reduction <maximumf>, %36, %cst_30 [1] : vector<10x10xf32> to vector<10xf32>
    %38 = vector.shape_cast %37 : vector<10xf32> to vector<10x1xf32>
    %39 = vector.broadcast %38 : vector<10x1xf32> to vector<10x10xf32>
    %40 = arith.subf %36, %39 : vector<10x10xf32>
    %41 = math.exp %40 : vector<10x10xf32>
    %cst_31 = arith.constant dense<0.000000e+00> : vector<10xf32>
    %42 = vector.multi_reduction <add>, %41, %cst_31 [1] : vector<10x10xf32> to vector<10xf32>
    %43 = vector.shape_cast %42 : vector<10xf32> to vector<10x1xf32>
    %44 = vector.broadcast %43 : vector<10x1xf32> to vector<10x10xf32>
    %45 = arith.divf %41, %44 : vector<10x10xf32>
    %cst_32 = arith.constant dense<0.000000e+00> : vector<10x16xf32>
    %46 = tpu.matmul %45, %35, %cst_32 {dimension_numbers = #tpu.dot_dimension_numbers<[1], [0], [0], [1], [0, 0, 1, 1], [], []>} : vector<10x10xf32>, vector<10x16xf32>, vector<10x16xf32> -> vector<10x16xf32>
    %c0_33 = arith.constant 0 : index
    %c0_34 = arith.constant 0 : index
    %c0_35 = arith.constant 0 : index
    %47 = vector.load %arg2[%c0_33, %c0_34, %c0_35] : memref<4x16x64xf32, #tpu.memory_space<vmem>>, vector<1x16x64xf32>
    %48 = vector.shape_cast %47 : vector<1x16x64xf32> to vector<16x64xf32>
    %cst_36 = arith.constant dense<0.000000e+00> : vector<10x64xf32>
    %49 = tpu.matmul %46, %48, %cst_36 {dimension_numbers = #tpu.dot_dimension_numbers<[1], [0], [0], [1], [0, 0, 1, 1], [], []>} : vector<10x16xf32>, vector<16x64xf32>, vector<10x64xf32> -> vector<10x64xf32>
    %50 = arith.addf %32, %49 : vector<10x64xf32>
    %51 = vector.extract_strided_slice %29 {offsets = [0, 16], sizes = [10, 16], strides = [1, 1]} : vector<10x64xf32> to vector<10x16xf32>
    %52 = vector.extract_strided_slice %30 {offsets = [0, 16], sizes = [10, 16], strides = [1, 1]} : vector<10x64xf32> to vector<10x16xf32>
    %53 = vector.extract_strided_slice %31 {offsets = [0, 16], sizes = [10, 16], strides = [1, 1]} : vector<10x64xf32> to vector<10x16xf32>
    %cst_37 = arith.constant dense<0.000000e+00> : vector<10x10xf32>
    %54 = tpu.matmul %51, %52, %cst_37 {dimension_numbers = #tpu.dot_dimension_numbers<[1], [1], [0], [0], [0, 0, 1, 0], [], []>} : vector<10x16xf32>, vector<10x16xf32>, vector<10x10xf32> -> vector<10x10xf32>
    %cst_38 = arith.constant dense<0xFF800000> : vector<10xf32>
    %55 = vector.multi_reduction <maximumf>, %54, %cst_38 [1] : vector<10x10xf32> to vector<10xf32>
    %56 = vector.shape_cast %55 : vector<10xf32> to vector<10x1xf32>
    %57 = vector.broadcast %56 : vector<10x1xf32> to vector<10x10xf32>
    %58 = arith.subf %54, %57 : vector<10x10xf32>
    %59 = math.exp %58 : vector<10x10xf32>
    %cst_39 = arith.constant dense<0.000000e+00> : vector<10xf32>
    %60 = vector.multi_reduction <add>, %59, %cst_39 [1] : vector<10x10xf32> to vector<10xf32>
    %61 = vector.shape_cast %60 : vector<10xf32> to vector<10x1xf32>
    %62 = vector.broadcast %61 : vector<10x1xf32> to vector<10x10xf32>
    %63 = arith.divf %59, %62 : vector<10x10xf32>
    %cst_40 = arith.constant dense<0.000000e+00> : vector<10x16xf32>
    %64 = tpu.matmul %63, %53, %cst_40 {dimension_numbers = #tpu.dot_dimension_numbers<[1], [0], [0], [1], [0, 0, 1, 1], [], []>} : vector<10x10xf32>, vector<10x16xf32>, vector<10x16xf32> -> vector<10x16xf32>
    %c1_41 = arith.constant 1 : index
    %c0_42 = arith.constant 0 : index
    %c0_43 = arith.constant 0 : index
    %65 = vector.load %arg2[%c1_41, %c0_42, %c0_43] : memref<4x16x64xf32, #tpu.memory_space<vmem>>, vector<1x16x64xf32>
    %66 = vector.shape_cast %65 : vector<1x16x64xf32> to vector<16x64xf32>
    %cst_44 = arith.constant dense<0.000000e+00> : vector<10x64xf32>
    %67 = tpu.matmul %64, %66, %cst_44 {dimension_numbers = #tpu.dot_dimension_numbers<[1], [0], [0], [1], [0, 0, 1, 1], [], []>} : vector<10x16xf32>, vector<16x64xf32>, vector<10x64xf32> -> vector<10x64xf32>
    %68 = arith.addf %50, %67 : vector<10x64xf32>
    %69 = vector.extract_strided_slice %29 {offsets = [0, 32], sizes = [10, 16], strides = [1, 1]} : vector<10x64xf32> to vector<10x16xf32>
    %70 = vector.extract_strided_slice %30 {offsets = [0, 32], sizes = [10, 16], strides = [1, 1]} : vector<10x64xf32> to vector<10x16xf32>
    %71 = vector.extract_strided_slice %31 {offsets = [0, 32], sizes = [10, 16], strides = [1, 1]} : vector<10x64xf32> to vector<10x16xf32>
    %cst_45 = arith.constant dense<0.000000e+00> : vector<10x10xf32>
    %72 = tpu.matmul %69, %70, %cst_45 {dimension_numbers = #tpu.dot_dimension_numbers<[1], [1], [0], [0], [0, 0, 1, 0], [], []>} : vector<10x16xf32>, vector<10x16xf32>, vector<10x10xf32> -> vector<10x10xf32>
    %cst_46 = arith.constant dense<0xFF800000> : vector<10xf32>
    %73 = vector.multi_reduction <maximumf>, %72, %cst_46 [1] : vector<10x10xf32> to vector<10xf32>
    %74 = vector.shape_cast %73 : vector<10xf32> to vector<10x1xf32>
    %75 = vector.broadcast %74 : vector<10x1xf32> to vector<10x10xf32>
    %76 = arith.subf %72, %75 : vector<10x10xf32>
    %77 = math.exp %76 : vector<10x10xf32>
    %cst_47 = arith.constant dense<0.000000e+00> : vector<10xf32>
    %78 = vector.multi_reduction <add>, %77, %cst_47 [1] : vector<10x10xf32> to vector<10xf32>
    %79 = vector.shape_cast %78 : vector<10xf32> to vector<10x1xf32>
    %80 = vector.broadcast %79 : vector<10x1xf32> to vector<10x10xf32>
    %81 = arith.divf %77, %80 : vector<10x10xf32>
    %cst_48 = arith.constant dense<0.000000e+00> : vector<10x16xf32>
    %82 = tpu.matmul %81, %71, %cst_48 {dimension_numbers = #tpu.dot_dimension_numbers<[1], [0], [0], [1], [0, 0, 1, 1], [], []>} : vector<10x10xf32>, vector<10x16xf32>, vector<10x16xf32> -> vector<10x16xf32>
    %c2_49 = arith.constant 2 : index
    %c0_50 = arith.constant 0 : index
    %c0_51 = arith.constant 0 : index
    %83 = vector.load %arg2[%c2_49, %c0_50, %c0_51] : memref<4x16x64xf32, #tpu.memory_space<vmem>>, vector<1x16x64xf32>
    %84 = vector.shape_cast %83 : vector<1x16x64xf32> to vector<16x64xf32>
    %cst_52 = arith.constant dense<0.000000e+00> : vector<10x64xf32>
    %85 = tpu.matmul %82, %84, %cst_52 {dimension_numbers = #tpu.dot_dimension_numbers<[1], [0], [0], [1], [0, 0, 1, 1], [], []>} : vector<10x16xf32>, vector<16x64xf32>, vector<10x64xf32> -> vector<10x64xf32>
    %86 = arith.addf %68, %85 : vector<10x64xf32>
    %87 = vector.extract_strided_slice %29 {offsets = [0, 48], sizes = [10, 16], strides = [1, 1]} : vector<10x64xf32> to vector<10x16xf32>
    %88 = vector.extract_strided_slice %30 {offsets = [0, 48], sizes = [10, 16], strides = [1, 1]} : vector<10x64xf32> to vector<10x16xf32>
    %89 = vector.extract_strided_slice %31 {offsets = [0, 48], sizes = [10, 16], strides = [1, 1]} : vector<10x64xf32> to vector<10x16xf32>
    %cst_53 = arith.constant dense<0.000000e+00> : vector<10x10xf32>
    %90 = tpu.matmul %87, %88, %cst_53 {dimension_numbers = #tpu.dot_dimension_numbers<[1], [1], [0], [0], [0, 0, 1, 0], [], []>} : vector<10x16xf32>, vector<10x16xf32>, vector<10x10xf32> -> vector<10x10xf32>
    %cst_54 = arith.constant dense<0xFF800000> : vector<10xf32>
    %91 = vector.multi_reduction <maximumf>, %90, %cst_54 [1] : vector<10x10xf32> to vector<10xf32>
    %92 = vector.shape_cast %91 : vector<10xf32> to vector<10x1xf32>
    %93 = vector.broadcast %92 : vector<10x1xf32> to vector<10x10xf32>
    %94 = arith.subf %90, %93 : vector<10x10xf32>
    %95 = math.exp %94 : vector<10x10xf32>
    %cst_55 = arith.constant dense<0.000000e+00> : vector<10xf32>
    %96 = vector.multi_reduction <add>, %95, %cst_55 [1] : vector<10x10xf32> to vector<10xf32>
    %97 = vector.shape_cast %96 : vector<10xf32> to vector<10x1xf32>
    %98 = vector.broadcast %97 : vector<10x1xf32> to vector<10x10xf32>
    %99 = arith.divf %95, %98 : vector<10x10xf32>
    %cst_56 = arith.constant dense<0.000000e+00> : vector<10x16xf32>
    %100 = tpu.matmul %99, %89, %cst_56 {dimension_numbers = #tpu.dot_dimension_numbers<[1], [0], [0], [1], [0, 0, 1, 1], [], []>} : vector<10x10xf32>, vector<10x16xf32>, vector<10x16xf32> -> vector<10x16xf32>
    %c3_57 = arith.constant 3 : index
    %c0_58 = arith.constant 0 : index
    %c0_59 = arith.constant 0 : index
    %101 = vector.load %arg2[%c3_57, %c0_58, %c0_59] : memref<4x16x64xf32, #tpu.memory_space<vmem>>, vector<1x16x64xf32>
    %102 = vector.shape_cast %101 : vector<1x16x64xf32> to vector<16x64xf32>
    %cst_60 = arith.constant dense<0.000000e+00> : vector<10x64xf32>
    %103 = tpu.matmul %100, %102, %cst_60 {dimension_numbers = #tpu.dot_dimension_numbers<[1], [0], [0], [1], [0, 0, 1, 1], [], []>} : vector<10x16xf32>, vector<16x64xf32>, vector<10x64xf32> -> vector<10x64xf32>
    %104 = arith.addf %86, %103 : vector<10x64xf32>
    %105 = vector.broadcast %28 : vector<1x64xf32> to vector<10x64xf32>
    %106 = arith.addf %104, %105 : vector<10x64xf32>
    %c0_61 = arith.constant 0 : index
    %c0_62 = arith.constant 0 : index
    %c0_63 = arith.constant 0 : index
    %107 = vector.load %arg4[%c0_61, %c0_62, %c0_63] : memref<2x10x64xf32, #tpu.memory_space<vmem>>, vector<1x10x64xf32>
    %108 = vector.shape_cast %107 : vector<1x10x64xf32> to vector<10x64xf32>
    %109 = vector.shape_cast %106 : vector<10x64xf32> to vector<1x10x64xf32>
    tpu.vector_store %arg4[%c0_61, %c0_62, %c0_63], %109 {strides = array<i32>} : memref<2x10x64xf32, #tpu.memory_space<vmem>>, vector<1x10x64xf32>,
    %110 = vector.extract_strided_slice %8 {offsets = [10, 0], sizes = [10, 64], strides = [1, 1]} : vector<20x64xf32> to vector<10x64xf32>
    %111 = vector.extract_strided_slice %17 {offsets = [10, 0], sizes = [10, 64], strides = [1, 1]} : vector<20x64xf32> to vector<10x64xf32>
    %112 = vector.extract_strided_slice %26 {offsets = [10, 0], sizes = [10, 64], strides = [1, 1]} : vector<20x64xf32> to vector<10x64xf32>
    %cst_64 = arith.constant 0.000000e+00 : f32
    %113 = vector.broadcast %cst_64 : f32 to vector<10x64xf32>
    %114 = vector.extract_strided_slice %110 {offsets = [0, 0], sizes = [10, 16], strides = [1, 1]} : vector<10x64xf32> to vector<10x16xf32>
    %115 = vector.extract_strided_slice %111 {offsets = [0, 0], sizes = [10, 16], strides = [1, 1]} : vector<10x64xf32> to vector<10x16xf32>
    %116 = vector.extract_strided_slice %112 {offsets = [0, 0], sizes = [10, 16], strides = [1, 1]} : vector<10x64xf32> to vector<10x16xf32>
    %cst_65 = arith.constant dense<0.000000e+00> : vector<10x10xf32>
    %117 = tpu.matmul %114, %115, %cst_65 {dimension_numbers = #tpu.dot_dimension_numbers<[1], [1], [0], [0], [0, 0, 1, 0], [], []>} : vector<10x16xf32>, vector<10x16xf32>, vector<10x10xf32> -> vector<10x10xf32>
    %cst_66 = arith.constant dense<0xFF800000> : vector<10xf32>
    %118 = vector.multi_reduction <maximumf>, %117, %cst_66 [1] : vector<10x10xf32> to vector<10xf32>
    %119 = vector.shape_cast %118 : vector<10xf32> to vector<10x1xf32>
    %120 = vector.broadcast %119 : vector<10x1xf32> to vector<10x10xf32>
    %121 = arith.subf %117, %120 : vector<10x10xf32>
    %122 = math.exp %121 : vector<10x10xf32>
    %cst_67 = arith.constant dense<0.000000e+00> : vector<10xf32>
    %123 = vector.multi_reduction <add>, %122, %cst_67 [1] : vector<10x10xf32> to vector<10xf32>
    %124 = vector.shape_cast %123 : vector<10xf32> to vector<10x1xf32>
    %125 = vector.broadcast %124 : vector<10x1xf32> to vector<10x10xf32>
    %126 = arith.divf %122, %125 : vector<10x10xf32>
    %cst_68 = arith.constant dense<0.000000e+00> : vector<10x16xf32>
    %127 = tpu.matmul %126, %116, %cst_68 {dimension_numbers = #tpu.dot_dimension_numbers<[1], [0], [0], [1], [0, 0, 1, 1], [], []>} : vector<10x10xf32>, vector<10x16xf32>, vector<10x16xf32> -> vector<10x16xf32>
    %c0_69 = arith.constant 0 : index
    %c0_70 = arith.constant 0 : index
    %c0_71 = arith.constant 0 : index
    %128 = vector.load %arg2[%c0_69, %c0_70, %c0_71] : memref<4x16x64xf32, #tpu.memory_space<vmem>>, vector<1x16x64xf32>
    %129 = vector.shape_cast %128 : vector<1x16x64xf32> to vector<16x64xf32>
    %cst_72 = arith.constant dense<0.000000e+00> : vector<10x64xf32>
    %130 = tpu.matmul %127, %129, %cst_72 {dimension_numbers = #tpu.dot_dimension_numbers<[1], [0], [0], [1], [0, 0, 1, 1], [], []>} : vector<10x16xf32>, vector<16x64xf32>, vector<10x64xf32> -> vector<10x64xf32>
    %131 = arith.addf %113, %130 : vector<10x64xf32>
    %132 = vector.extract_strided_slice %110 {offsets = [0, 16], sizes = [10, 16], strides = [1, 1]} : vector<10x64xf32> to vector<10x16xf32>
    %133 = vector.extract_strided_slice %111 {offsets = [0, 16], sizes = [10, 16], strides = [1, 1]} : vector<10x64xf32> to vector<10x16xf32>
    %134 = vector.extract_strided_slice %112 {offsets = [0, 16], sizes = [10, 16], strides = [1, 1]} : vector<10x64xf32> to vector<10x16xf32>
    %cst_73 = arith.constant dense<0.000000e+00> : vector<10x10xf32>
    %135 = tpu.matmul %132, %133, %cst_73 {dimension_numbers = #tpu.dot_dimension_numbers<[1], [1], [0], [0], [0, 0, 1, 0], [], []>} : vector<10x16xf32>, vector<10x16xf32>, vector<10x10xf32> -> vector<10x10xf32>
    %cst_74 = arith.constant dense<0xFF800000> : vector<10xf32>
    %136 = vector.multi_reduction <maximumf>, %135, %cst_74 [1] : vector<10x10xf32> to vector<10xf32>
    %137 = vector.shape_cast %136 : vector<10xf32> to vector<10x1xf32>
    %138 = vector.broadcast %137 : vector<10x1xf32> to vector<10x10xf32>
    %139 = arith.subf %135, %138 : vector<10x10xf32>
    %140 = math.exp %139 : vector<10x10xf32>
    %cst_75 = arith.constant dense<0.000000e+00> : vector<10xf32>
    %141 = vector.multi_reduction <add>, %140, %cst_75 [1] : vector<10x10xf32> to vector<10xf32>
    %142 = vector.shape_cast %141 : vector<10xf32> to vector<10x1xf32>
    %143 = vector.broadcast %142 : vector<10x1xf32> to vector<10x10xf32>
    %144 = arith.divf %140, %143 : vector<10x10xf32>
    %cst_76 = arith.constant dense<0.000000e+00> : vector<10x16xf32>
    %145 = tpu.matmul %144, %134, %cst_76 {dimension_numbers = #tpu.dot_dimension_numbers<[1], [0], [0], [1], [0, 0, 1, 1], [], []>} : vector<10x10xf32>, vector<10x16xf32>, vector<10x16xf32> -> vector<10x16xf32>
    %c1_77 = arith.constant 1 : index
    %c0_78 = arith.constant 0 : index
    %c0_79 = arith.constant 0 : index
    %146 = vector.load %arg2[%c1_77, %c0_78, %c0_79] : memref<4x16x64xf32, #tpu.memory_space<vmem>>, vector<1x16x64xf32>
    %147 = vector.shape_cast %146 : vector<1x16x64xf32> to vector<16x64xf32>
    %cst_80 = arith.constant dense<0.000000e+00> : vector<10x64xf32>
    %148 = tpu.matmul %145, %147, %cst_80 {dimension_numbers = #tpu.dot_dimension_numbers<[1], [0], [0], [1], [0, 0, 1, 1], [], []>} : vector<10x16xf32>, vector<16x64xf32>, vector<10x64xf32> -> vector<10x64xf32>
    %149 = arith.addf %131, %148 : vector<10x64xf32>
    %150 = vector.extract_strided_slice %110 {offsets = [0, 32], sizes = [10, 16], strides = [1, 1]} : vector<10x64xf32> to vector<10x16xf32>
    %151 = vector.extract_strided_slice %111 {offsets = [0, 32], sizes = [10, 16], strides = [1, 1]} : vector<10x64xf32> to vector<10x16xf32>
    %152 = vector.extract_strided_slice %112 {offsets = [0, 32], sizes = [10, 16], strides = [1, 1]} : vector<10x64xf32> to vector<10x16xf32>
    %cst_81 = arith.constant dense<0.000000e+00> : vector<10x10xf32>
    %153 = tpu.matmul %150, %151, %cst_81 {dimension_numbers = #tpu.dot_dimension_numbers<[1], [1], [0], [0], [0, 0, 1, 0], [], []>} : vector<10x16xf32>, vector<10x16xf32>, vector<10x10xf32> -> vector<10x10xf32>
    %cst_82 = arith.constant dense<0xFF800000> : vector<10xf32>
    %154 = vector.multi_reduction <maximumf>, %153, %cst_82 [1] : vector<10x10xf32> to vector<10xf32>
    %155 = vector.shape_cast %154 : vector<10xf32> to vector<10x1xf32>
    %156 = vector.broadcast %155 : vector<10x1xf32> to vector<10x10xf32>
    %157 = arith.subf %153, %156 : vector<10x10xf32>
    %158 = math.exp %157 : vector<10x10xf32>
    %cst_83 = arith.constant dense<0.000000e+00> : vector<10xf32>
    %159 = vector.multi_reduction <add>, %158, %cst_83 [1] : vector<10x10xf32> to vector<10xf32>
    %160 = vector.shape_cast %159 : vector<10xf32> to vector<10x1xf32>
    %161 = vector.broadcast %160 : vector<10x1xf32> to vector<10x10xf32>
    %162 = arith.divf %158, %161 : vector<10x10xf32>
    %cst_84 = arith.constant dense<0.000000e+00> : vector<10x16xf32>
    %163 = tpu.matmul %162, %152, %cst_84 {dimension_numbers = #tpu.dot_dimension_numbers<[1], [0], [0], [1], [0, 0, 1, 1], [], []>} : vector<10x10xf32>, vector<10x16xf32>, vector<10x16xf32> -> vector<10x16xf32>
    %c2_85 = arith.constant 2 : index
    %c0_86 = arith.constant 0 : index
    %c0_87 = arith.constant 0 : index
    %164 = vector.load %arg2[%c2_85, %c0_86, %c0_87] : memref<4x16x64xf32, #tpu.memory_space<vmem>>, vector<1x16x64xf32>
    %165 = vector.shape_cast %164 : vector<1x16x64xf32> to vector<16x64xf32>
    %cst_88 = arith.constant dense<0.000000e+00> : vector<10x64xf32>
    %166 = tpu.matmul %163, %165, %cst_88 {dimension_numbers = #tpu.dot_dimension_numbers<[1], [0], [0], [1], [0, 0, 1, 1], [], []>} : vector<10x16xf32>, vector<16x64xf32>, vector<10x64xf32> -> vector<10x64xf32>
    %167 = arith.addf %149, %166 : vector<10x64xf32>
    %168 = vector.extract_strided_slice %110 {offsets = [0, 48], sizes = [10, 16], strides = [1, 1]} : vector<10x64xf32> to vector<10x16xf32>
    %169 = vector.extract_strided_slice %111 {offsets = [0, 48], sizes = [10, 16], strides = [1, 1]} : vector<10x64xf32> to vector<10x16xf32>
    %170 = vector.extract_strided_slice %112 {offsets = [0, 48], sizes = [10, 16], strides = [1, 1]} : vector<10x64xf32> to vector<10x16xf32>
    %cst_89 = arith.constant dense<0.000000e+00> : vector<10x10xf32>
    %171 = tpu.matmul %168, %169, %cst_89 {dimension_numbers = #tpu.dot_dimension_numbers<[1], [1], [0], [0], [0, 0, 1, 0], [], []>} : vector<10x16xf32>, vector<10x16xf32>, vector<10x10xf32> -> vector<10x10xf32>
    %cst_90 = arith.constant dense<0xFF800000> : vector<10xf32>
    %172 = vector.multi_reduction <maximumf>, %171, %cst_90 [1] : vector<10x10xf32> to vector<10xf32>
    %173 = vector.shape_cast %172 : vector<10xf32> to vector<10x1xf32>
    %174 = vector.broadcast %173 : vector<10x1xf32> to vector<10x10xf32>
    %175 = arith.subf %171, %174 : vector<10x10xf32>
    %176 = math.exp %175 : vector<10x10xf32>
    %cst_91 = arith.constant dense<0.000000e+00> : vector<10xf32>
    %177 = vector.multi_reduction <add>, %176, %cst_91 [1] : vector<10x10xf32> to vector<10xf32>
    %178 = vector.shape_cast %177 : vector<10xf32> to vector<10x1xf32>
    %179 = vector.broadcast %178 : vector<10x1xf32> to vector<10x10xf32>
    %180 = arith.divf %176, %179 : vector<10x10xf32>
    %cst_92 = arith.constant dense<0.000000e+00> : vector<10x16xf32>
    %181 = tpu.matmul %180, %170, %cst_92 {dimension_numbers = #tpu.dot_dimension_numbers<[1], [0], [0], [1], [0, 0, 1, 1], [], []>} : vector<10x10xf32>, vector<10x16xf32>, vector<10x16xf32> -> vector<10x16xf32>
    %c3_93 = arith.constant 3 : index
    %c0_94 = arith.constant 0 : index
    %c0_95 = arith.constant 0 : index
    %182 = vector.load %arg2[%c3_93, %c0_94, %c0_95] : memref<4x16x64xf32, #tpu.memory_space<vmem>>, vector<1x16x64xf32>
    %183 = vector.shape_cast %182 : vector<1x16x64xf32> to vector<16x64xf32>
    %cst_96 = arith.constant dense<0.000000e+00> : vector<10x64xf32>
    %184 = tpu.matmul %181, %183, %cst_96 {dimension_numbers = #tpu.dot_dimension_numbers<[1], [0], [0], [1], [0, 0, 1, 1], [], []>} : vector<10x16xf32>, vector<16x64xf32>, vector<10x64xf32> -> vector<10x64xf32>
    %185 = arith.addf %167, %184 : vector<10x64xf32>
    %186 = vector.broadcast %28 : vector<1x64xf32> to vector<10x64xf32>
    %187 = arith.addf %185, %186 : vector<10x64xf32>
    %c1_97 = arith.constant 1 : index
    %c0_98 = arith.constant 0 : index
    %c0_99 = arith.constant 0 : index
    %188 = vector.load %arg4[%c1_97, %c0_98, %c0_99] : memref<2x10x64xf32, #tpu.memory_space<vmem>>, vector<1x10x64xf32>
    %189 = vector.shape_cast %188 : vector<1x10x64xf32> to vector<10x64xf32>
    %190 = vector.shape_cast %187 : vector<10x64xf32> to vector<1x10x64xf32>
    tpu.vector_store %arg4[%c1_97, %c0_98, %c0_99], %190 {strides = array<i32>} : memref<2x10x64xf32, #tpu.memory_space<vmem>>, vector<1x10x64xf32>,
    return
  }
}

</mosaic_0001>

<llo_original>
// kernel: multihead_attention.1
$region0: #{multihead_attention.1}
  #allocation0 [shape = 'u32[]', space=smem, size = 0x4, offset = 0x4, fixed_abs, tag = 'smem constant byte address 0x4 - core index']
  #allocation1 [shape = 'u32[144,128]{1,0:T(1,128)}', space=vmem, size = 0x12000, scoped, tag = 'internal scratch']
  %s0 = inlined_call_operand.vmem [shape: f32[3,20,64], index: 0, kind: input, shape index: {}]
  %s1 = inlined_call_operand.vmem [shape: f32[3,64,64], index: 1, kind: input, shape index: {}]
  %s2 = inlined_call_operand.vmem [shape: f32[4,16,64], index: 2, kind: input, shape index: {}]
  %s3 = inlined_call_operand.vmem [shape: f32[4,1,64], index: 3, kind: input, shape index: {}]
  %s4 = inlined_call_operand.vmem [shape: f32[2,10,64], index: 4, kind: output, shape index: {}]
  %s5 = sld [smem:[#allocation0]]
  $region26: #{multihead_attention.1} parent=0
    _
  %s7 = ssub.s32 1, %s5
  %s8 = scalar_select 0, %s7, %s5
  // Predicated region
  $region2: #{multihead_attention.1} parent=0 // pred_check
    _
  $region3: #{multihead_attention.1} parent=0 // pred_check_branch
    %10 = sbr.rel (0) target = $region5
  $region4: #{multihead_attention.1} parent=0 // pred_region
    _
  $region5: #{multihead_attention.1} parent=0 // pred_fallthru
    _
  // Predicated region
  $region6: #{multihead_attention.1} parent=0 // pred_check
    _
  $region7: #{multihead_attention.1} parent=0 // pred_check_branch
    %12 = sbr.rel (0) target = $region9
  $region8: #{multihead_attention.1} parent=0 // pred_region
    _
  $region9: #{multihead_attention.1} parent=0 // pred_fallthru
    _
  // Predicated region
  $region10: #{multihead_attention.1} parent=0 // pred_check
    _
  $region11: #{multihead_attention.1} parent=0 // pred_check_branch
    %14 = sbr.rel (0) target = $region13
  $region12: #{multihead_attention.1} parent=0 // pred_region
    _
  $region13: #{multihead_attention.1} parent=0 // pred_fallthru
    _
  // Predicated region
  $region14: #{multihead_attention.1} parent=0 // pred_check
    _
  $region15: #{multihead_attention.1} parent=0 // pred_check_branch
    %16 = sbr.rel (0) target = $region17
  $region16: #{multihead_attention.1} parent=0 // pred_region
    _
  $region17: #{multihead_attention.1} parent=0 // pred_fallthru
    _
  %v17 = vld [vmem:[%s0] sm:$0xff]
  %v18 = vld [vmem:[%s0 + $0x8] sm:$0xff]
  %v19 = vld [vmem:[%s0 + $0x10] sm:$0xf]
  %v20 = vld [vmem:[%s1] sm:$0xff]
  %v21 = vld [vmem:[%s1 + $0x8] sm:$0xff]
  %v22 = vld [vmem:[%s1 + $0x10] sm:$0xff]
  %v23 = vld [vmem:[%s1 + $0x18] sm:$0xff]
  %v24 = vld [vmem:[%s1 + $0x20] sm:$0xff]
  %v25 = vld [vmem:[%s1 + $0x28] sm:$0xff]
  %v26 = vld [vmem:[%s1 + $0x30] sm:$0xff]
  %v27 = vld [vmem:[%s1 + $0x38] sm:$0xff]
  %v28 = vld [vmem:[%s3] sm:$0x1]
  %v30 = vlaneseq
  %v31 = vshrl.u32 %v30, 7
  %v32 = vsub.s32 0, %v31
  %v33 = vrot.slane %v28, %v32
  %vm35 = vcmask 523264
  %v37 = vsel %vm35, %v17, 0
  %v40 = vsel %vm35, %v18, 0
  %v43 = vsel %vm35, %v19, 0
  %45 = vmatprep.subr.mxu0 0.0
  %46 = vmatpush1.msra.mxu0 %v20
  %47 = vmatprep.subr.mxu0 0.0
  %48 = vmatpush1.msra.mxu0 %v21
  %49 = vmatprep.subr.mxu0 0.0
  %50 = vmatpush1.msra.mxu0 %v22
  %51 = vmatprep.subr.mxu0 0.0
  %52 = vmatpush1.msra.mxu0 %v23
  %53 = vmatprep.subr.mxu0 0.0
  %54 = vmatpush1.msra.mxu0 %v24
  %55 = vmatprep.subr.mxu0 0.0
  %56 = vmatpush1.msra.mxu0 %v25
  %57 = vmatprep.subr.mxu0 0.0
  %58 = vmatpush1.msra.mxu0 %v26
  %59 = vmatprep.subr.mxu0 0.0
  %60 = vmatpush1.msra.mxu0 %v27
  %61 = vmatprep.subr.mxu0 0.0
  %62 = vmatpush1.msra.mxu0 0.0
  %63 = vmatprep.subr.mxu0 0.0
  %64 = vmatpush1.msra.mxu0 0.0
  %65 = vmatprep.subr.mxu0 0.0
  %66 = vmatpush1.msra.mxu0 0.0
  %67 = vmatprep.subr.mxu0 0.0
  %68 = vmatpush1.msra.mxu0 0.0
  %69 = vmatprep.subr.mxu0 0.0
  %70 = vmatpush1.msra.mxu0 0.0
  %71 = vmatprep.subr.mxu0 0.0
  %72 = vmatpush1.msra.mxu0 0.0
  %73 = vmatprep.subr.mxu0 0.0
  %74 = vmatpush1.msra.mxu0 0.0
  %75 = vmatprep.subr.mxu0 0.0
  %76 = vmatpush1.msra.mxu0 0.0
  %77 = vmatprep.subr.mxu0 0.0
  %78 = vmatpush1.msra.mxu0 0.0
  %79 = vmatprep.subr.mxu0 0.0
  %80 = vmatpush1.msra.mxu0 0.0
  %81 = vmatprep.subr.mxu0 0.0
  %82 = vmatpush1.msra.mxu0 0.0
  %83 = vmatprep.subr.mxu0 0.0
  %84 = vmatpush1.msra.mxu0 0.0
  %85 = vmatprep.subr.mxu0 0.0
  %86 = vmatpush1.msra.mxu0 0.0
  %87 = vmatprep.subr.mxu0 0.0
  %88 = vmatpush1.msra.mxu0 0.0
  %89 = vmatprep.subr.mxu0 0.0
  %90 = vmatpush1.msra.mxu0 0.0
  %91 = vmatprep.subr.mxu0 0.0
  %92 = vmatpush1.msra.mxu0 0.0
  %93 = vmatprep.subr.mxu0 0.0
  %94 = vmatpush1.msra.mxu0 0.0
  %95 = vmatprep.subr.mxu0 0.0
  %96 = vmatpush1.msra.mxu0 0.0
  %97 = vmatprep.subr.mxu0 0.0
  %98 = vmatpush1.msra.mxu0 0.0
  %99 = vmatprep.subr.mxu0 0.0
  %100 = vmatpush1.msra.mxu0 0.0
  %101 = vmatprep.subr.mxu0 0.0
  %102 = vmatpush1.msra.mxu0 0.0
  %103 = vmatprep.subr.mxu0 0.0
  %104 = vmatpush1.msra.mxu0 0.0
  %105 = vmatprep.subr.mxu0 0.0
  %106 = vmatpush1.msra.mxu0 0.0
  %107 = vmatprep.subr.mxu0 0.0
  %108 = vmatpush1.msra.mxu0 0.0
  %109 = vmatprep.mubr.f32.mxu0 0.0
  %110 = vmatmul.mubr.f32.gmra.mrb[0].mxu0 %v37
  %v111 = vpop.f32.mrb[0].mxu0
  %v112 = vadd.f32 %v33, %v111
  %v113 = vpop.f32.mrb[0].mxu0
  %114 = vmatprep.mubr.f32.mxu0 0.0
  %115 = vmatmul.mubr.f32.gmra.mrb[0].mxu0 %v40
  %v116 = vpop.f32.mrb[0].mxu0
  %v117 = vadd.f32 %v33, %v116
  %v118 = vpop.f32.mrb[0].mxu0
  %119 = vmatprep.mubr.f32.mxu0 0.0
  %120 = vmatmul.mubr.f32.gmra.mrb[0].mxu0 %v43
  %v121 = vpop.f32.mrb[0].mxu0
  %v122 = vadd.f32 %v33, %v121
  %v123 = vpop.f32.mrb[0].mxu0
  %124 = vdwg.mxu0
  %s125 = scalar_lea.vmem %s0, 24
  %v126 = vld [vmem:[%s125] sm:$0xff]
  %v127 = vld [vmem:[%s125 + $0x8] sm:$0xff]
  %v128 = vld [vmem:[%s125 + $0x10] sm:$0xf]
  %s129 = scalar_lea.vmem %s1, 64
  %v130 = vld [vmem:[%s129] sm:$0xff]
  %v131 = vld [vmem:[%s129 + $0x8] sm:$0xff]
  %v132 = vld [vmem:[%s129 + $0x10] sm:$0xff]
  %v133 = vld [vmem:[%s129 + $0x18] sm:$0xff]
  %v134 = vld [vmem:[%s129 + $0x20] sm:$0xff]
  %v135 = vld [vmem:[%s129 + $0x28] sm:$0xff]
  %v136 = vld [vmem:[%s129 + $0x30] sm:$0xff]
  %v137 = vld [vmem:[%s129 + $0x38] sm:$0xff]
  %s138 = scalar_lea.vmem %s3, 1
  %v139 = vld [vmem:[%s138] sm:$0x1]
  %v141 = vlaneseq
  %v142 = vshrl.u32 %v141, 7
  %v143 = vsub.s32 0, %v142
  %v144 = vrot.slane %v139, %v143
  %v147 = vsel %vm35, %v126, 0
  %v150 = vsel %vm35, %v127, 0
  %v153 = vsel %vm35, %v128, 0
  %155 = vmatprep.subr.mxu0 0.0
  %156 = vmatpush1.msra.mxu0 %v130
  %157 = vmatprep.subr.mxu0 0.0
  %158 = vmatpush1.msra.mxu0 %v131
  %159 = vmatprep.subr.mxu0 0.0
  %160 = vmatpush1.msra.mxu0 %v132
  %161 = vmatprep.subr.mxu0 0.0
  %162 = vmatpush1.msra.mxu0 %v133
  %163 = vmatprep.subr.mxu0 0.0
  %164 = vmatpush1.msra.mxu0 %v134
  %165 = vmatprep.subr.mxu0 0.0
  %166 = vmatpush1.msra.mxu0 %v135
  %167 = vmatprep.subr.mxu0 0.0
  %168 = vmatpush1.msra.mxu0 %v136
  %169 = vmatprep.subr.mxu0 0.0
  %170 = vmatpush1.msra.mxu0 %v137
  %171 = vmatprep.subr.mxu0 0.0
  %172 = vmatpush1.msra.mxu0 0.0
  %173 = vmatprep.subr.mxu0 0.0
  %174 = vmatpush1.msra.mxu0 0.0
  %175 = vmatprep.subr.mxu0 0.0
  %176 = vmatpush1.msra.mxu0 0.0
  %177 = vmatprep.subr.mxu0 0.0
  %178 = vmatpush1.msra.mxu0 0.0
  %179 = vmatprep.subr.mxu0 0.0
  %180 = vmatpush1.msra.mxu0 0.0
  %181 = vmatprep.subr.mxu0 0.0
  %182 = vmatpush1.msra.mxu0 0.0
  %183 = vmatprep.subr.mxu0 0.0
  %184 = vmatpush1.msra.mxu0 0.0
  %185 = vmatprep.subr.mxu0 0.0
  %186 = vmatpush1.msra.mxu0 0.0
  %187 = vmatprep.subr.mxu0 0.0
  %188 = vmatpush1.msra.mxu0 0.0
  %189 = vmatprep.subr.mxu0 0.0
  %190 = vmatpush1.msra.mxu0 0.0
  %191 = vmatprep.subr.mxu0 0.0
  %192 = vmatpush1.msra.mxu0 0.0
  %193 = vmatprep.subr.mxu0 0.0
  %194 = vmatpush1.msra.mxu0 0.0
  %195 = vmatprep.subr.mxu0 0.0
  %196 = vmatpush1.msra.mxu0 0.0
  %197 = vmatprep.subr.mxu0 0.0
  %198 = vmatpush1.msra.mxu0 0.0
  %199 = vmatprep.subr.mxu0 0.0
  %200 = vmatpush1.msra.mxu0 0.0
  %201 = vmatprep.subr.mxu0 0.0
  %202 = vmatpush1.msra.mxu0 0.0
  %203 = vmatprep.subr.mxu0 0.0
  %204 = vmatpush1.msra.mxu0 0.0
  %205 = vmatprep.subr.mxu0 0.0
  %206 = vmatpush1.msra.mxu0 0.0
  %207 = vmatprep.subr.mxu0 0.0
  %208 = vmatpush1.msra.mxu0 0.0
  %209 = vmatprep.subr.mxu0 0.0
  %210 = vmatpush1.msra.mxu0 0.0
  %211 = vmatprep.subr.mxu0 0.0
  %212 = vmatpush1.msra.mxu0 0.0
  %213 = vmatprep.subr.mxu0 0.0
  %214 = vmatpush1.msra.mxu0 0.0
  %215 = vmatprep.subr.mxu0 0.0
  %216 = vmatpush1.msra.mxu0 0.0
  %217 = vmatprep.subr.mxu0 0.0
  %218 = vmatpush1.msra.mxu0 0.0
  %219 = vmatprep.mubr.f32.mxu0 0.0
  %220 = vmatmul.mubr.f32.gmra.mrb[0].mxu0 %v147
  %v221 = vpop.f32.mrb[0].mxu0
  %v222 = vadd.f32 %v144, %v221
  %v223 = vpop.f32.mrb[0].mxu0
  %224 = vmatprep.mubr.f32.mxu0 0.0
  %225 = vmatmul.mubr.f32.gmra.mrb[0].mxu0 %v150
  %v226 = vpop.f32.mrb[0].mxu0
  %v227 = vadd.f32 %v144, %v226
  %v228 = vpop.f32.mrb[0].mxu0
  %229 = vmatprep.mubr.f32.mxu0 0.0
  %230 = vmatmul.mubr.f32.gmra.mrb[0].mxu0 %v153
  %v231 = vpop.f32.mrb[0].mxu0
  %v232 = vadd.f32 %v144, %v231
  %v233 = vpop.f32.mrb[0].mxu0
  %234 = vdwg.mxu0
  %s235 = scalar_lea.vmem %s0, 48
  %v236 = vld [vmem:[%s235] sm:$0xff]
  %v237 = vld [vmem:[%s235 + $0x8] sm:$0xff]
  %v238 = vld [vmem:[%s235 + $0x10] sm:$0xf]
  %s239 = scalar_lea.vmem %s1, 128
  %v240 = vld [vmem:[%s239] sm:$0xff]
  %v241 = vld [vmem:[%s239 + $0x8] sm:$0xff]
  %v242 = vld [vmem:[%s239 + $0x10] sm:$0xff]
  %v243 = vld [vmem:[%s239 + $0x18] sm:$0xff]
  %v244 = vld [vmem:[%s239 + $0x20] sm:$0xff]
  %v245 = vld [vmem:[%s239 + $0x28] sm:$0xff]
  %v246 = vld [vmem:[%s239 + $0x30] sm:$0xff]
  %v247 = vld [vmem:[%s239 + $0x38] sm:$0xff]
  %s248 = scalar_lea.vmem %s3, 2
  %v249 = vld [vmem:[%s248] sm:$0x1]
  %v251 = vlaneseq
  %v252 = vshrl.u32 %v251, 7
  %v253 = vsub.s32 0, %v252
  %v254 = vrot.slane %v249, %v253
  %v257 = vsel %vm35, %v236, 0
  %v260 = vsel %vm35, %v237, 0
  %v263 = vsel %vm35, %v238, 0
  %265 = vmatprep.subr.mxu0 0.0
  %266 = vmatpush1.msra.mxu0 %v240
  %267 = vmatprep.subr.mxu0 0.0
  %268 = vmatpush1.msra.mxu0 %v241
  %269 = vmatprep.subr.mxu0 0.0
  %270 = vmatpush1.msra.mxu0 %v242
  %271 = vmatprep.subr.mxu0 0.0
  %272 = vmatpush1.msra.mxu0 %v243
  %273 = vmatprep.subr.mxu0 0.0
  %274 = vmatpush1.msra.mxu0 %v244
  %275 = vmatprep.subr.mxu0 0.0
  %276 = vmatpush1.msra.mxu0 %v245
  %277 = vmatprep.subr.mxu0 0.0
  %278 = vmatpush1.msra.mxu0 %v246
  %279 = vmatprep.subr.mxu0 0.0
  %280 = vmatpush1.msra.mxu0 %v247
  %281 = vmatprep.subr.mxu0 0.0
  %282 = vmatpush1.msra.mxu0 0.0
  %283 = vmatprep.subr.mxu0 0.0
  %284 = vmatpush1.msra.mxu0 0.0
  %285 = vmatprep.subr.mxu0 0.0
  %286 = vmatpush1.msra.mxu0 0.0
  %287 = vmatprep.subr.mxu0 0.0
  %288 = vmatpush1.msra.mxu0 0.0
  %289 = vmatprep.subr.mxu0 0.0
  %290 = vmatpush1.msra.mxu0 0.0
  %291 = vmatprep.subr.mxu0 0.0
  %292 = vmatpush1.msra.mxu0 0.0
  %293 = vmatprep.subr.mxu0 0.0
  %294 = vmatpush1.msra.mxu0 0.0
  %295 = vmatprep.subr.mxu0 0.0
  %296 = vmatpush1.msra.mxu0 0.0
  %297 = vmatprep.subr.mxu0 0.0
  %298 = vmatpush1.msra.mxu0 0.0
  %299 = vmatprep.subr.mxu0 0.0
  %300 = vmatpush1.msra.mxu0 0.0
  %301 = vmatprep.subr.mxu0 0.0
  %302 = vmatpush1.msra.mxu0 0.0
  %303 = vmatprep.subr.mxu0 0.0
  %304 = vmatpush1.msra.mxu0 0.0
  %305 = vmatprep.subr.mxu0 0.0
  %306 = vmatpush1.msra.mxu0 0.0
  %307 = vmatprep.subr.mxu0 0.0
  %308 = vmatpush1.msra.mxu0 0.0
  %309 = vmatprep.subr.mxu0 0.0
  %310 = vmatpush1.msra.mxu0 0.0
  %311 = vmatprep.subr.mxu0 0.0
  %312 = vmatpush1.msra.mxu0 0.0
  %313 = vmatprep.subr.mxu0 0.0
  %314 = vmatpush1.msra.mxu0 0.0
  %315 = vmatprep.subr.mxu0 0.0
  %316 = vmatpush1.msra.mxu0 0.0
  %317 = vmatprep.subr.mxu0 0.0
  %318 = vmatpush1.msra.mxu0 0.0
  %319 = vmatprep.subr.mxu0 0.0
  %320 = vmatpush1.msra.mxu0 0.0
  %321 = vmatprep.subr.mxu0 0.0
  %322 = vmatpush1.msra.mxu0 0.0
  %323 = vmatprep.subr.mxu0 0.0
  %324 = vmatpush1.msra.mxu0 0.0
  %325 = vmatprep.subr.mxu0 0.0
  %326 = vmatpush1.msra.mxu0 0.0
  %327 = vmatprep.subr.mxu0 0.0
  %328 = vmatpush1.msra.mxu0 0.0
  %329 = vmatprep.mubr.f32.mxu0 0.0
  %330 = vmatmul.mubr.f32.gmra.mrb[0].mxu0 %v257
  %v331 = vpop.f32.mrb[0].mxu0
  %v332 = vadd.f32 %v254, %v331
  %v333 = vpop.f32.mrb[0].mxu0
  %334 = vmatprep.mubr.f32.mxu0 0.0
  %335 = vmatmul.mubr.f32.gmra.mrb[0].mxu0 %v260
  %v336 = vpop.f32.mrb[0].mxu0
  %v337 = vadd.f32 %v254, %v336
  %v338 = vpop.f32.mrb[0].mxu0
  %339 = vmatprep.mubr.f32.mxu0 0.0
  %340 = vmatmul.mubr.f32.gmra.mrb[0].mxu0 %v263
  %v341 = vpop.f32.mrb[0].mxu0
  %v342 = vadd.f32 %v254, %v341
  %v343 = vpop.f32.mrb[0].mxu0
  %344 = vdwg.mxu0
  %s345 = scalar_lea.vmem %s3, 3
  %v346 = vld [vmem:[%s345] sm:$0x1]
  %vm347 = vcmask 130048
  %v349 = vsel %vm347, %v112, 0
  %v352 = vsel %vm347, %v117, 0
  %v355 = vsel %vm347, %v222, 0
  %v358 = vsel %vm347, %v227, 0
  %360 = vmatprep.subr.mxu0 0.0
  %361 = vmatpush1.xpose.msra.mxu0 %v355
  %362 = vmatprep.subr.mxu0 0.0
  %363 = vmatpush1.xpose.msra.mxu0 %v358
  %364 = vmatprep.subr.mxu0 0.0
  %365 = vmatpush1.xpose.msra.mxu0 0.0
  %366 = vmatprep.subr.mxu0 0.0
  %367 = vmatpush1.xpose.msra.mxu0 0.0
  %368 = vmatprep.subr.mxu0 0.0
  %369 = vmatpush1.xpose.msra.mxu0 0.0
  %370 = vmatprep.subr.mxu0 0.0
  %371 = vmatpush1.xpose.msra.mxu0 0.0
  %372 = vmatprep.subr.mxu0 0.0
  %373 = vmatpush1.xpose.msra.mxu0 0.0
  %374 = vmatprep.subr.mxu0 0.0
  %375 = vmatpush1.xpose.msra.mxu0 0.0
  %376 = vmatprep.subr.mxu0 0.0
  %377 = vmatpush1.xpose.msra.mxu0 0.0
  %378 = vmatprep.subr.mxu0 0.0
  %379 = vmatpush1.xpose.msra.mxu0 0.0
  %380 = vmatprep.subr.mxu0 0.0
  %381 = vmatpush1.xpose.msra.mxu0 0.0
  %382 = vmatprep.subr.mxu0 0.0
  %383 = vmatpush1.xpose.msra.mxu0 0.0
  %384 = vmatprep.subr.mxu0 0.0
  %385 = vmatpush1.xpose.msra.mxu0 0.0
  %386 = vmatprep.subr.mxu0 0.0
  %387 = vmatpush1.xpose.msra.mxu0 0.0
  %388 = vmatprep.subr.mxu0 0.0
  %389 = vmatpush1.xpose.msra.mxu0 0.0
  %390 = vmatprep.subr.mxu0 0.0
  %391 = vmatpush1.xpose.msra.mxu0 0.0
  %392 = vmatprep.subr.mxu0 0.0
  %393 = vmatpush1.xpose.msra.mxu0 0.0
  %394 = vmatprep.subr.mxu0 0.0
  %395 = vmatpush1.xpose.msra.mxu0 0.0
  %396 = vmatprep.subr.mxu0 0.0
  %397 = vmatpush1.xpose.msra.mxu0 0.0
  %398 = vmatprep.subr.mxu0 0.0
  %399 = vmatpush1.xpose.msra.mxu0 0.0
  %400 = vmatprep.subr.mxu0 0.0
  %401 = vmatpush1.xpose.msra.mxu0 0.0
  %402 = vmatprep.subr.mxu0 0.0
  %403 = vmatpush1.xpose.msra.mxu0 0.0
  %404 = vmatprep.subr.mxu0 0.0
  %405 = vmatpush1.xpose.msra.mxu0 0.0
  %406 = vmatprep.subr.mxu0 0.0
  %407 = vmatpush1.xpose.msra.mxu0 0.0
  %408 = vmatprep.subr.mxu0 0.0
  %409 = vmatpush1.xpose.msra.mxu0 0.0
  %410 = vmatprep.subr.mxu0 0.0
  %411 = vmatpush1.xpose.msra.mxu0 0.0
  %412 = vmatprep.subr.mxu0 0.0
  %413 = vmatpush1.xpose.msra.mxu0 0.0
  %414 = vmatprep.subr.mxu0 0.0
  %415 = vmatpush1.xpose.msra.mxu0 0.0
  %416 = vmatprep.subr.mxu0 0.0
  %417 = vmatpush1.xpose.msra.mxu0 0.0
  %418 = vmatprep.subr.mxu0 0.0
  %419 = vmatpush1.xpose.msra.mxu0 0.0
  %420 = vmatprep.subr.mxu0 0.0
  %421 = vmatpush1.xpose.msra.mxu0 0.0
  %422 = vmatprep.subr.mxu0 0.0
  %423 = vmatpush1.xpose.msra.mxu0 0.0
  %424 = vmatprep.mubr.f32.mxu0 0.0
  %425 = vmatmul.mubr.f32.gmra.mrb[0].mxu0 %v349
  %v426 = vpop.f32.mrb[0].mxu0
  %v427 = vadd.f32 0.0, %v426
  %v428 = vpop.f32.mrb[0].mxu0
  %429 = vmatprep.mubr.f32.mxu0 0.0
  %430 = vmatmul.mubr.f32.gmra.mrb[0].mxu0 %v352
  %v431 = vpop.f32.mrb[0].mxu0
  %v432 = vadd.f32 0.0, %v431
  %v433 = vpop.f32.mrb[0].mxu0
  %434 = vdwg.mxu0
  %vm435 = vcmask 80896
  %v436 = vsel %vm435, %v427, -inf
  %437 = vmax.xlane.f32.xlu0 %v436
  %v438 = vpop.xlane.xlu0 %437
  %vm439 = vcmask 74752
  %v440 = vsel %vm439, %v432, -inf
  %441 = vmax.xlane.f32.xlu0 %v440
  %v442 = vpop.xlane.xlu0 %441
  %v443 = vsub.f32 %v427, %v438
  %v444 = vsub.f32 %v432, %v442
  %v445 = vmul.f32 %v443, 1.442695
  %v446 = vpow.pop %v445
  %v447 = vmul.f32 %v444, 1.442695
  %v448 = vpow.pop %v447
  %v449 = vsel %vm435, %v446, 0.0
  %450 = vadd.xlane.f32.xlu0 %v449
  %v451 = vpop.xlane.xlu0 %450
  %v452 = vsel %vm439, %v448, 0.0
  %453 = vadd.xlane.f32.xlu0 %v452
  %v454 = vpop.xlane.xlu0 %453
  %v455 = vrcp.pop %v451
  %v456 = vmul.f32 %v446, %v455
  %v457 = vrcp.pop %v454
  %v458 = vmul.f32 %v448, %v457
  %v460 = vsel %vm435, %v456, 0
  %v463 = vsel %vm435, %v458, 0
  %vm465 = vcmask 1041408
  %v467 = vsel %vm465, %v337, 0
  %469 = vmatprep.subr.mxu0 0.0
  %470 = vmatpush1.msra.mxu0 %v332
  %471 = vmatprep.subr.mxu0 0.0
  %472 = vmatpush1.msra.mxu0 %v467
  %473 = vmatprep.subr.mxu0 0.0
  %474 = vmatpush1.msra.mxu0 0.0
  %475 = vmatprep.subr.mxu0 0.0
  %476 = vmatpush1.msra.mxu0 0.0
  %477 = vmatprep.subr.mxu0 0.0
  %478 = vmatpush1.msra.mxu0 0.0
  %479 = vmatprep.subr.mxu0 0.0
  %480 = vmatpush1.msra.mxu0 0.0
  %481 = vmatprep.subr.mxu0 0.0
  %482 = vmatpush1.msra.mxu0 0.0
  %483 = vmatprep.subr.mxu0 0.0
  %484 = vmatpush1.msra.mxu0 0.0
  %485 = vmatprep.subr.mxu0 0.0
  %486 = vmatpush1.msra.mxu0 0.0
  %487 = vmatprep.subr.mxu0 0.0
  %488 = vmatpush1.msra.mxu0 0.0
  %489 = vmatprep.subr.mxu0 0.0
  %490 = vmatpush1.msra.mxu0 0.0
  %491 = vmatprep.subr.mxu0 0.0
  %492 = vmatpush1.msra.mxu0 0.0
  %493 = vmatprep.subr.mxu0 0.0
  %494 = vmatpush1.msra.mxu0 0.0
  %495 = vmatprep.subr.mxu0 0.0
  %496 = vmatpush1.msra.mxu0 0.0
  %497 = vmatprep.subr.mxu0 0.0
  %498 = vmatpush1.msra.mxu0 0.0
  %499 = vmatprep.subr.mxu0 0.0
  %500 = vmatpush1.msra.mxu0 0.0
  %501 = vmatprep.subr.mxu0 0.0
  %502 = vmatpush1.msra.mxu0 0.0
  %503 = vmatprep.subr.mxu0 0.0
  %504 = vmatpush1.msra.mxu0 0.0
  %505 = vmatprep.subr.mxu0 0.0
  %506 = vmatpush1.msra.mxu0 0.0
  %507 = vmatprep.subr.mxu0 0.0
  %508 = vmatpush1.msra.mxu0 0.0
  %509 = vmatprep.subr.mxu0 0.0
  %510 = vmatpush1.msra.mxu0 0.0
  %511 = vmatprep.subr.mxu0 0.0
  %512 = vmatpush1.msra.mxu0 0.0
  %513 = vmatprep.subr.mxu0 0.0
  %514 = vmatpush1.msra.mxu0 0.0
  %515 = vmatprep.subr.mxu0 0.0
  %516 = vmatpush1.msra.mxu0 0.0
  %517 = vmatprep.subr.mxu0 0.0
  %518 = vmatpush1.msra.mxu0 0.0
  %519 = vmatprep.subr.mxu0 0.0
  %520 = vmatpush1.msra.mxu0 0.0
  %521 = vmatprep.subr.mxu0 0.0
  %522 = vmatpush1.msra.mxu0 0.0
  %523 = vmatprep.subr.mxu0 0.0
  %524 = vmatpush1.msra.mxu0 0.0
  %525 = vmatprep.subr.mxu0 0.0
  %526 = vmatpush1.msra.mxu0 0.0
  %527 = vmatprep.subr.mxu0 0.0
  %528 = vmatpush1.msra.mxu0 0.0
  %529 = vmatprep.subr.mxu0 0.0
  %530 = vmatpush1.msra.mxu0 0.0
  %531 = vmatprep.subr.mxu0 0.0
  %532 = vmatpush1.msra.mxu0 0.0
  %533 = vmatprep.mubr.f32.mxu0 0.0
  %534 = vmatmul.mubr.f32.gmra.mrb[0].mxu0 %v460
  %v535 = vpop.f32.mrb[0].mxu0
  %v536 = vadd.f32 0.0, %v535
  %v537 = vpop.f32.mrb[0].mxu0
  %538 = vmatprep.mubr.f32.mxu0 0.0
  %539 = vmatmul.mubr.f32.gmra.mrb[0].mxu0 %v463
  %v540 = vpop.f32.mrb[0].mxu0
  %v541 = vadd.f32 0.0, %v540
  %v542 = vpop.f32.mrb[0].mxu0
  %543 = vdwg.mxu0
  %v544 = vld [vmem:[%s2] sm:$0xff]
  %v545 = vld [vmem:[%s2 + $0x8] sm:$0xff]
  %546 = vrot.lane.b32.xlu0 %v112, 112
  %v547 = vpop.permute.xlu0 %546
  %548 = vrot.lane.b32.xlu0 %v117, 112
  %v549 = vpop.permute.xlu0 %548
  %550 = vrot.lane.b32.xlu0 %v222, 112
  %v551 = vpop.permute.xlu0 %550
  %552 = vrot.lane.b32.xlu0 %v227, 112
  %v553 = vpop.permute.xlu0 %552
  %v554 = vsel %vm347, %v547, 0
  %v556 = vsel %vm347, %v549, 0
  %v558 = vsel %vm347, %v551, 0
  %v560 = vsel %vm347, %v553, 0
  %562 = vmatprep.subr.mxu0 0.0
  %563 = vmatpush1.xpose.msra.mxu0 %v558
  %564 = vmatprep.subr.mxu0 0.0
  %565 = vmatpush1.xpose.msra.mxu0 %v560
  %566 = vmatprep.subr.mxu0 0.0
  %567 = vmatpush1.xpose.msra.mxu0 0.0
  %568 = vmatprep.subr.mxu0 0.0
  %569 = vmatpush1.xpose.msra.mxu0 0.0
  %570 = vmatprep.subr.mxu0 0.0
  %571 = vmatpush1.xpose.msra.mxu0 0.0
  %572 = vmatprep.subr.mxu0 0.0
  %573 = vmatpush1.xpose.msra.mxu0 0.0
  %574 = vmatprep.subr.mxu0 0.0
  %575 = vmatpush1.xpose.msra.mxu0 0.0
  %576 = vmatprep.subr.mxu0 0.0
  %577 = vmatpush1.xpose.msra.mxu0 0.0
  %578 = vmatprep.subr.mxu0 0.0
  %579 = vmatpush1.xpose.msra.mxu0 0.0
  %580 = vmatprep.subr.mxu0 0.0
  %581 = vmatpush1.xpose.msra.mxu0 0.0
  %582 = vmatprep.subr.mxu0 0.0
  %583 = vmatpush1.xpose.msra.mxu0 0.0
  %584 = vmatprep.subr.mxu0 0.0
  %585 = vmatpush1.xpose.msra.mxu0 0.0
  %586 = vmatprep.subr.mxu0 0.0
  %587 = vmatpush1.xpose.msra.mxu0 0.0
  %588 = vmatprep.subr.mxu0 0.0
  %589 = vmatpush1.xpose.msra.mxu0 0.0
  %590 = vmatprep.subr.mxu0 0.0
  %591 = vmatpush1.xpose.msra.mxu0 0.0
  %592 = vmatprep.subr.mxu0 0.0
  %593 = vmatpush1.xpose.msra.mxu0 0.0
  %594 = vmatprep.subr.mxu0 0.0
  %595 = vmatpush1.xpose.msra.mxu0 0.0
  %596 = vmatprep.subr.mxu0 0.0
  %597 = vmatpush1.xpose.msra.mxu0 0.0
  %598 = vmatprep.subr.mxu0 0.0
  %599 = vmatpush1.xpose.msra.mxu0 0.0
  %600 = vmatprep.subr.mxu0 0.0
  %601 = vmatpush1.xpose.msra.mxu0 0.0
  %602 = vmatprep.subr.mxu0 0.0
  %603 = vmatpush1.xpose.msra.mxu0 0.0
  %604 = vmatprep.subr.mxu0 0.0
  %605 = vmatpush1.xpose.msra.mxu0 0.0
  %606 = vmatprep.subr.mxu0 0.0
  %607 = vmatpush1.xpose.msra.mxu0 0.0
  %608 = vmatprep.subr.mxu0 0.0
  %609 = vmatpush1.xpose.msra.mxu0 0.0
  %610 = vmatprep.subr.mxu0 0.0
  %611 = vmatpush1.xpose.msra.mxu0 0.0
  %612 = vmatprep.subr.mxu0 0.0
  %613 = vmatpush1.xpose.msra.mxu0 0.0
  %614 = vmatprep.subr.mxu0 0.0
  %615 = vmatpush1.xpose.msra.mxu0 0.0
  %616 = vmatprep.subr.mxu0 0.0
  %617 = vmatpush1.xpose.msra.mxu0 0.0
  %618 = vmatprep.subr.mxu0 0.0
  %619 = vmatpush1.xpose.msra.mxu0 0.0
  %620 = vmatprep.subr.mxu0 0.0
  %621 = vmatpush1.xpose.msra.mxu0 0.0
  %622 = vmatprep.subr.mxu0 0.0
  %623 = vmatpush1.xpose.msra.mxu0 0.0
  %624 = vmatprep.subr.mxu0 0.0
  %625 = vmatpush1.xpose.msra.mxu0 0.0
  %626 = vmatprep.mubr.f32.mxu0 0.0
  %627 = vmatmul.mubr.f32.gmra.mrb[0].mxu0 %v554
  %v628 = vpop.f32.mrb[0].mxu0
  %v629 = vadd.f32 0.0, %v628
  %v630 = vpop.f32.mrb[0].mxu0
  %631 = vmatprep.mubr.f32.mxu0 0.0
  %632 = vmatmul.mubr.f32.gmra.mrb[0].mxu0 %v556
  %v633 = vpop.f32.mrb[0].mxu0
  %v634 = vadd.f32 0.0, %v633
  %v635 = vpop.f32.mrb[0].mxu0
  %636 = vdwg.mxu0
  %v637 = vsel %vm435, %v629, -inf
  %638 = vmax.xlane.f32.xlu0 %v637
  %v639 = vpop.xlane.xlu0 %638
  %v640 = vsel %vm439, %v634, -inf
  %641 = vmax.xlane.f32.xlu0 %v640
  %v642 = vpop.xlane.xlu0 %641
  %v643 = vsub.f32 %v629, %v639
  %v644 = vsub.f32 %v634, %v642
  %v645 = vmul.f32 %v643, 1.442695
  %v646 = vpow.pop %v645
  %v647 = vmul.f32 %v644, 1.442695
  %v648 = vpow.pop %v647
  %v649 = vsel %vm435, %v646, 0.0
  %650 = vadd.xlane.f32.xlu0 %v649
  %v651 = vpop.xlane.xlu0 %650
  %v652 = vsel %vm439, %v648, 0.0
  %653 = vadd.xlane.f32.xlu0 %v652
  %v654 = vpop.xlane.xlu0 %653
  %v655 = vrcp.pop %v651
  %v656 = vmul.f32 %v646, %v655
  %v657 = vrcp.pop %v654
  %v658 = vmul.f32 %v648, %v657
  %660 = vrot.lane.b32.xlu0 %v332, 112
  %v661 = vpop.permute.xlu0 %660
  %662 = vrot.lane.b32.xlu0 %v337, 112
  %v663 = vpop.permute.xlu0 %662
  %v666 = vsel %vm435, %v656, 0
  %v669 = vsel %vm435, %v658, 0
  %v671 = vsel %vm465, %v663, 0
  %673 = vmatprep.subr.mxu0 0.0
  %674 = vmatpush1.msra.mxu0 %v661
  %675 = vmatprep.subr.mxu0 0.0
  %676 = vmatpush1.msra.mxu0 %v671
  %677 = vmatprep.subr.mxu0 0.0
  %678 = vmatpush1.msra.mxu0 0.0
  %679 = vmatprep.subr.mxu0 0.0
  %680 = vmatpush1.msra.mxu0 0.0
  %681 = vmatprep.subr.mxu0 0.0
  %682 = vmatpush1.msra.mxu0 0.0
  %683 = vmatprep.subr.mxu0 0.0
  %684 = vmatpush1.msra.mxu0 0.0
  %685 = vmatprep.subr.mxu0 0.0
  %686 = vmatpush1.msra.mxu0 0.0
  %687 = vmatprep.subr.mxu0 0.0
  %688 = vmatpush1.msra.mxu0 0.0
  %689 = vmatprep.subr.mxu0 0.0
  %690 = vmatpush1.msra.mxu0 0.0
  %691 = vmatprep.subr.mxu0 0.0
  %692 = vmatpush1.msra.mxu0 0.0
  %693 = vmatprep.subr.mxu0 0.0
  %694 = vmatpush1.msra.mxu0 0.0
  %695 = vmatprep.subr.mxu0 0.0
  %696 = vmatpush1.msra.mxu0 0.0
  %697 = vmatprep.subr.mxu0 0.0
  %698 = vmatpush1.msra.mxu0 0.0
  %699 = vmatprep.subr.mxu0 0.0
  %700 = vmatpush1.msra.mxu0 0.0
  %701 = vmatprep.subr.mxu0 0.0
  %702 = vmatpush1.msra.mxu0 0.0
  %703 = vmatprep.subr.mxu0 0.0
  %704 = vmatpush1.msra.mxu0 0.0
  %705 = vmatprep.subr.mxu0 0.0
  %706 = vmatpush1.msra.mxu0 0.0
  %707 = vmatprep.subr.mxu0 0.0
  %708 = vmatpush1.msra.mxu0 0.0
  %709 = vmatprep.subr.mxu0 0.0
  %710 = vmatpush1.msra.mxu0 0.0
  %711 = vmatprep.subr.mxu0 0.0
  %712 = vmatpush1.msra.mxu0 0.0
  %713 = vmatprep.subr.mxu0 0.0
  %714 = vmatpush1.msra.mxu0 0.0
  %715 = vmatprep.subr.mxu0 0.0
  %716 = vmatpush1.msra.mxu0 0.0
  %717 = vmatprep.subr.mxu0 0.0
  %718 = vmatpush1.msra.mxu0 0.0
  %719 = vmatprep.subr.mxu0 0.0
  %720 = vmatpush1.msra.mxu0 0.0
  %721 = vmatprep.subr.mxu0 0.0
  %722 = vmatpush1.msra.mxu0 0.0
  %723 = vmatprep.subr.mxu0 0.0
  %724 = vmatpush1.msra.mxu0 0.0
  %725 = vmatprep.subr.mxu0 0.0
  %726 = vmatpush1.msra.mxu0 0.0
  %727 = vmatprep.subr.mxu0 0.0
  %728 = vmatpush1.msra.mxu0 0.0
  %729 = vmatprep.subr.mxu0 0.0
  %730 = vmatpush1.msra.mxu0 0.0
  %731 = vmatprep.subr.mxu0 0.0
  %732 = vmatpush1.msra.mxu0 0.0
  %733 = vmatprep.subr.mxu0 0.0
  %734 = vmatpush1.msra.mxu0 0.0
  %735 = vmatprep.subr.mxu0 0.0
  %736 = vmatpush1.msra.mxu0 0.0
  %737 = vmatprep.mubr.f32.mxu0 0.0
  %738 = vmatmul.mubr.f32.gmra.mrb[0].mxu0 %v666
  %v739 = vpop.f32.mrb[0].mxu0
  %v740 = vadd.f32 0.0, %v739
  %v741 = vpop.f32.mrb[0].mxu0
  %742 = vmatprep.mubr.f32.mxu0 0.0
  %743 = vmatmul.mubr.f32.gmra.mrb[0].mxu0 %v669
  %v744 = vpop.f32.mrb[0].mxu0
  %v745 = vadd.f32 0.0, %v744
  %v746 = vpop.f32.mrb[0].mxu0
  %747 = vdwg.mxu0
  %s748 = scalar_lea.vmem %s2, 16
  %v749 = vld [vmem:[%s748] sm:$0xff]
  %v750 = vld [vmem:[%s748 + $0x8] sm:$0xff]
  %v752 = vsel %vm347, %v740, 0
  %v755 = vsel %vm347, %v745, 0
  %757 = vmatprep.subr.mxu0 0.0
  %758 = vmatpush1.msra.mxu0 %v749
  %759 = vmatprep.subr.mxu0 0.0
  %760 = vmatpush1.msra.mxu0 %v750
  %761 = vmatprep.subr.mxu0 0.0
  %762 = vmatpush1.msra.mxu0 0.0
  %763 = vmatprep.subr.mxu0 0.0
  %764 = vmatpush1.msra.mxu0 0.0
  %765 = vmatprep.subr.mxu0 0.0
  %766 = vmatpush1.msra.mxu0 0.0
  %767 = vmatprep.subr.mxu0 0.0
  %768 = vmatpush1.msra.mxu0 0.0
  %769 = vmatprep.subr.mxu0 0.0
  %770 = vmatpush1.msra.mxu0 0.0
  %771 = vmatprep.subr.mxu0 0.0
  %772 = vmatpush1.msra.mxu0 0.0
  %773 = vmatprep.subr.mxu0 0.0
  %774 = vmatpush1.msra.mxu0 0.0
  %775 = vmatprep.subr.mxu0 0.0
  %776 = vmatpush1.msra.mxu0 0.0
  %777 = vmatprep.subr.mxu0 0.0
  %778 = vmatpush1.msra.mxu0 0.0
  %779 = vmatprep.subr.mxu0 0.0
  %780 = vmatpush1.msra.mxu0 0.0
  %781 = vmatprep.subr.mxu0 0.0
  %782 = vmatpush1.msra.mxu0 0.0
  %783 = vmatprep.subr.mxu0 0.0
  %784 = vmatpush1.msra.mxu0 0.0
  %785 = vmatprep.subr.mxu0 0.0
  %786 = vmatpush1.msra.mxu0 0.0
  %787 = vmatprep.subr.mxu0 0.0
  %788 = vmatpush1.msra.mxu0 0.0
  %789 = vmatprep.subr.mxu0 0.0
  %790 = vmatpush1.msra.mxu0 0.0
  %791 = vmatprep.subr.mxu0 0.0
  %792 = vmatpush1.msra.mxu0 0.0
  %793 = vmatprep.subr.mxu0 0.0
  %794 = vmatpush1.msra.mxu0 0.0
  %795 = vmatprep.subr.mxu0 0.0
  %796 = vmatpush1.msra.mxu0 0.0
  %797 = vmatprep.subr.mxu0 0.0
  %798 = vmatpush1.msra.mxu0 0.0
  %799 = vmatprep.subr.mxu0 0.0
  %800 = vmatpush1.msra.mxu0 0.0
  %801 = vmatprep.subr.mxu0 0.0
  %802 = vmatpush1.msra.mxu0 0.0
  %803 = vmatprep.subr.mxu0 0.0
  %804 = vmatpush1.msra.mxu0 0.0
  %805 = vmatprep.subr.mxu0 0.0
  %806 = vmatpush1.msra.mxu0 0.0
  %807 = vmatprep.subr.mxu0 0.0
  %808 = vmatpush1.msra.mxu0 0.0
  %809 = vmatprep.subr.mxu0 0.0
  %810 = vmatpush1.msra.mxu0 0.0
  %811 = vmatprep.subr.mxu0 0.0
  %812 = vmatpush1.msra.mxu0 0.0
  %813 = vmatprep.subr.mxu0 0.0
  %814 = vmatpush1.msra.mxu0 0.0
  %815 = vmatprep.subr.mxu0 0.0
  %816 = vmatpush1.msra.mxu0 0.0
  %817 = vmatprep.subr.mxu0 0.0
  %818 = vmatpush1.msra.mxu0 0.0
  %819 = vmatprep.subr.mxu0 0.0
  %820 = vmatpush1.msra.mxu0 0.0
  %821 = vmatprep.mubr.f32.mxu0 0.0
  %822 = vmatmul.mubr.f32.gmra.mrb[0].mxu0 %v752
  %v823 = vpop.f32.mrb[0].mxu0
  %v824 = vadd.f32 0.0, %v823
  %v825 = vpop.f32.mrb[0].mxu0
  %826 = vmatprep.mubr.f32.mxu0 0.0
  %827 = vmatmul.mubr.f32.gmra.mrb[0].mxu0 %v755
  %v828 = vpop.f32.mrb[0].mxu0
  %v829 = vadd.f32 0.0, %v828
  %v830 = vpop.f32.mrb[0].mxu0
  %831 = vdwg.mxu0
  %v833 = vsel %vm347, %v536, 0
  %v836 = vsel %vm347, %v541, 0
  %838 = vmatprep.subr.mxu0 0.0
  %839 = vmatpush1.msra.mxu0 %v544
  %840 = vmatprep.subr.mxu0 0.0
  %841 = vmatpush1.msra.mxu0 %v545
  %842 = vmatprep.subr.mxu0 0.0
  %843 = vmatpush1.msra.mxu0 0.0
  %844 = vmatprep.subr.mxu0 0.0
  %845 = vmatpush1.msra.mxu0 0.0
  %846 = vmatprep.subr.mxu0 0.0
  %847 = vmatpush1.msra.mxu0 0.0
  %848 = vmatprep.subr.mxu0 0.0
  %849 = vmatpush1.msra.mxu0 0.0
  %850 = vmatprep.subr.mxu0 0.0
  %851 = vmatpush1.msra.mxu0 0.0
  %852 = vmatprep.subr.mxu0 0.0
  %853 = vmatpush1.msra.mxu0 0.0
  %854 = vmatprep.subr.mxu0 0.0
  %855 = vmatpush1.msra.mxu0 0.0
  %856 = vmatprep.subr.mxu0 0.0
  %857 = vmatpush1.msra.mxu0 0.0
  %858 = vmatprep.subr.mxu0 0.0
  %859 = vmatpush1.msra.mxu0 0.0
  %860 = vmatprep.subr.mxu0 0.0
  %861 = vmatpush1.msra.mxu0 0.0
  %862 = vmatprep.subr.mxu0 0.0
  %863 = vmatpush1.msra.mxu0 0.0
  %864 = vmatprep.subr.mxu0 0.0
  %865 = vmatpush1.msra.mxu0 0.0
  %866 = vmatprep.subr.mxu0 0.0
  %867 = vmatpush1.msra.mxu0 0.0
  %868 = vmatprep.subr.mxu0 0.0
  %869 = vmatpush1.msra.mxu0 0.0
  %870 = vmatprep.subr.mxu0 0.0
  %871 = vmatpush1.msra.mxu0 0.0
  %872 = vmatprep.subr.mxu0 0.0
  %873 = vmatpush1.msra.mxu0 0.0
  %874 = vmatprep.subr.mxu0 0.0
  %875 = vmatpush1.msra.mxu0 0.0
  %876 = vmatprep.subr.mxu0 0.0
  %877 = vmatpush1.msra.mxu0 0.0
  %878 = vmatprep.subr.mxu0 0.0
  %879 = vmatpush1.msra.mxu0 0.0
  %880 = vmatprep.subr.mxu0 0.0
  %881 = vmatpush1.msra.mxu0 0.0
  %882 = vmatprep.subr.mxu0 0.0
  %883 = vmatpush1.msra.mxu0 0.0
  %884 = vmatprep.subr.mxu0 0.0
  %885 = vmatpush1.msra.mxu0 0.0
  %886 = vmatprep.subr.mxu0 0.0
  %887 = vmatpush1.msra.mxu0 0.0
  %888 = vmatprep.subr.mxu0 0.0
  %889 = vmatpush1.msra.mxu0 0.0
  %890 = vmatprep.subr.mxu0 0.0
  %891 = vmatpush1.msra.mxu0 0.0
  %892 = vmatprep.subr.mxu0 0.0
  %893 = vmatpush1.msra.mxu0 0.0
  %894 = vmatprep.subr.mxu0 0.0
  %895 = vmatpush1.msra.mxu0 0.0
  %896 = vmatprep.subr.mxu0 0.0
  %897 = vmatpush1.msra.mxu0 0.0
  %898 = vmatprep.subr.mxu0 0.0
  %899 = vmatpush1.msra.mxu0 0.0
  %900 = vmatprep.subr.mxu0 0.0
  %901 = vmatpush1.msra.mxu0 0.0
  %902 = vmatprep.mubr.f32.mxu0 0.0
  %903 = vmatmul.mubr.f32.gmra.mrb[0].mxu0 %v833
  %v904 = vpop.f32.mrb[0].mxu0
  %v905 = vadd.f32 %v824, %v904
  %v906 = vpop.f32.mrb[0].mxu0
  %907 = vmatprep.mubr.f32.mxu0 0.0
  %908 = vmatmul.mubr.f32.gmra.mrb[0].mxu0 %v836
  %v909 = vpop.f32.mrb[0].mxu0
  %v910 = vadd.f32 %v829, %v909
  %v911 = vpop.f32.mrb[0].mxu0
  %912 = vdwg.mxu0
  %913 = vrot.lane.b32.xlu0 %v112, 96
  %v914 = vpop.permute.xlu0 %913
  %915 = vrot.lane.b32.xlu0 %v117, 96
  %v916 = vpop.permute.xlu0 %915
  %917 = vrot.lane.b32.xlu0 %v222, 96
  %v918 = vpop.permute.xlu0 %917
  %919 = vrot.lane.b32.xlu0 %v227, 96
  %v920 = vpop.permute.xlu0 %919
  %v921 = vsel %vm347, %v914, 0
  %v923 = vsel %vm347, %v916, 0
  %v925 = vsel %vm347, %v918, 0
  %v927 = vsel %vm347, %v920, 0
  %929 = vmatprep.subr.mxu0 0.0
  %930 = vmatpush1.xpose.msra.mxu0 %v925
  %931 = vmatprep.subr.mxu0 0.0
  %932 = vmatpush1.xpose.msra.mxu0 %v927
  %933 = vmatprep.subr.mxu0 0.0
  %934 = vmatpush1.xpose.msra.mxu0 0.0
  %935 = vmatprep.subr.mxu0 0.0
  %936 = vmatpush1.xpose.msra.mxu0 0.0
  %937 = vmatprep.subr.mxu0 0.0
  %938 = vmatpush1.xpose.msra.mxu0 0.0
  %939 = vmatprep.subr.mxu0 0.0
  %940 = vmatpush1.xpose.msra.mxu0 0.0
  %941 = vmatprep.subr.mxu0 0.0
  %942 = vmatpush1.xpose.msra.mxu0 0.0
  %943 = vmatprep.subr.mxu0 0.0
  %944 = vmatpush1.xpose.msra.mxu0 0.0
  %945 = vmatprep.subr.mxu0 0.0
  %946 = vmatpush1.xpose.msra.mxu0 0.0
  %947 = vmatprep.subr.mxu0 0.0
  %948 = vmatpush1.xpose.msra.mxu0 0.0
  %949 = vmatprep.subr.mxu0 0.0
  %950 = vmatpush1.xpose.msra.mxu0 0.0
  %951 = vmatprep.subr.mxu0 0.0
  %952 = vmatpush1.xpose.msra.mxu0 0.0
  %953 = vmatprep.subr.mxu0 0.0
  %954 = vmatpush1.xpose.msra.mxu0 0.0
  %955 = vmatprep.subr.mxu0 0.0
  %956 = vmatpush1.xpose.msra.mxu0 0.0
  %957 = vmatprep.subr.mxu0 0.0
  %958 = vmatpush1.xpose.msra.mxu0 0.0
  %959 = vmatprep.subr.mxu0 0.0
  %960 = vmatpush1.xpose.msra.mxu0 0.0
  %961 = vmatprep.subr.mxu0 0.0
  %962 = vmatpush1.xpose.msra.mxu0 0.0
  %963 = vmatprep.subr.mxu0 0.0
  %964 = vmatpush1.xpose.msra.mxu0 0.0
  %965 = vmatprep.subr.mxu0 0.0
  %966 = vmatpush1.xpose.msra.mxu0 0.0
  %967 = vmatprep.subr.mxu0 0.0
  %968 = vmatpush1.xpose.msra.mxu0 0.0
  %969 = vmatprep.subr.mxu0 0.0
  %970 = vmatpush1.xpose.msra.mxu0 0.0
  %971 = vmatprep.subr.mxu0 0.0
  %972 = vmatpush1.xpose.msra.mxu0 0.0
  %973 = vmatprep.subr.mxu0 0.0
  %974 = vmatpush1.xpose.msra.mxu0 0.0
  %975 = vmatprep.subr.mxu0 0.0
  %976 = vmatpush1.xpose.msra.mxu0 0.0
  %977 = vmatprep.subr.mxu0 0.0
  %978 = vmatpush1.xpose.msra.mxu0 0.0
  %979 = vmatprep.subr.mxu0 0.0
  %980 = vmatpush1.xpose.msra.mxu0 0.0
  %981 = vmatprep.subr.mxu0 0.0
  %982 = vmatpush1.xpose.msra.mxu0 0.0
  %983 = vmatprep.subr.mxu0 0.0
  %984 = vmatpush1.xpose.msra.mxu0 0.0
  %985 = vmatprep.subr.mxu0 0.0
  %986 = vmatpush1.xpose.msra.mxu0 0.0
  %987 = vmatprep.subr.mxu0 0.0
  %988 = vmatpush1.xpose.msra.mxu0 0.0
  %989 = vmatprep.subr.mxu0 0.0
  %990 = vmatpush1.xpose.msra.mxu0 0.0
  %991 = vmatprep.subr.mxu0 0.0
  %992 = vmatpush1.xpose.msra.mxu0 0.0
  %993 = vmatprep.mubr.f32.mxu0 0.0
  %994 = vmatmul.mubr.f32.gmra.mrb[0].mxu0 %v921
  %v995 = vpop.f32.mrb[0].mxu0
  %v996 = vadd.f32 0.0, %v995
  %v997 = vpop.f32.mrb[0].mxu0
  %998 = vmatprep.mubr.f32.mxu0 0.0
  %999 = vmatmul.mubr.f32.gmra.mrb[0].mxu0 %v923
  %v1000 = vpop.f32.mrb[0].mxu0
  %v1001 = vadd.f32 0.0, %v1000
  %v1002 = vpop.f32.mrb[0].mxu0
  %1003 = vdwg.mxu0
  %v1004 = vsel %vm435, %v996, -inf
  %1005 = vmax.xlane.f32.xlu0 %v1004
  %v1006 = vpop.xlane.xlu0 %1005
  %v1007 = vsel %vm439, %v1001, -inf
  %1008 = vmax.xlane.f32.xlu0 %v1007
  %v1009 = vpop.xlane.xlu0 %1008
  %v1010 = vsub.f32 %v996, %v1006
  %v1011 = vsub.f32 %v1001, %v1009
  %v1012 = vmul.f32 %v1010, 1.442695
  %v1013 = vpow.pop %v1012
  %v1014 = vmul.f32 %v1011, 1.442695
  %v1015 = vpow.pop %v1014
  %v1016 = vsel %vm435, %v1013, 0.0
  %1017 = vadd.xlane.f32.xlu0 %v1016
  %v1018 = vpop.xlane.xlu0 %1017
  %v1019 = vsel %vm439, %v1015, 0.0
  %1020 = vadd.xlane.f32.xlu0 %v1019
  %v1021 = vpop.xlane.xlu0 %1020
  %v1022 = vrcp.pop %v1018
  %v1023 = vmul.f32 %v1013, %v1022
  %v1024 = vrcp.pop %v1021
  %v1025 = vmul.f32 %v1015, %v1024
  %1026 = vrot.lane.b32.xlu0 %v332, 96
  %v1027 = vpop.permute.xlu0 %1026
  %1028 = vrot.lane.b32.xlu0 %v337, 96
  %v1029 = vpop.permute.xlu0 %1028
  %v1032 = vsel %vm435, %v1023, 0
  %v1035 = vsel %vm435, %v1025, 0
  %v1037 = vsel %vm465, %v1029, 0
  %1039 = vmatprep.subr.mxu0 0.0
  %1040 = vmatpush1.msra.mxu0 %v1027
  %1041 = vmatprep.subr.mxu0 0.0
  %1042 = vmatpush1.msra.mxu0 %v1037
  %1043 = vmatprep.subr.mxu0 0.0
  %1044 = vmatpush1.msra.mxu0 0.0
  %1045 = vmatprep.subr.mxu0 0.0
  %1046 = vmatpush1.msra.mxu0 0.0
  %1047 = vmatprep.subr.mxu0 0.0
  %1048 = vmatpush1.msra.mxu0 0.0
  %1049 = vmatprep.subr.mxu0 0.0
  %1050 = vmatpush1.msra.mxu0 0.0
  %1051 = vmatprep.subr.mxu0 0.0
  %1052 = vmatpush1.msra.mxu0 0.0
  %1053 = vmatprep.subr.mxu0 0.0
  %1054 = vmatpush1.msra.mxu0 0.0
  %1055 = vmatprep.subr.mxu0 0.0
  %1056 = vmatpush1.msra.mxu0 0.0
  %1057 = vmatprep.subr.mxu0 0.0
  %1058 = vmatpush1.msra.mxu0 0.0
  %1059 = vmatprep.subr.mxu0 0.0
  %1060 = vmatpush1.msra.mxu0 0.0
  %1061 = vmatprep.subr.mxu0 0.0
  %1062 = vmatpush1.msra.mxu0 0.0
  %1063 = vmatprep.subr.mxu0 0.0
  %1064 = vmatpush1.msra.mxu0 0.0
  %1065 = vmatprep.subr.mxu0 0.0
  %1066 = vmatpush1.msra.mxu0 0.0
  %1067 = vmatprep.subr.mxu0 0.0
  %1068 = vmatpush1.msra.mxu0 0.0
  %1069 = vmatprep.subr.mxu0 0.0
  %1070 = vmatpush1.msra.mxu0 0.0
  %1071 = vmatprep.subr.mxu0 0.0
  %1072 = vmatpush1.msra.mxu0 0.0
  %1073 = vmatprep.subr.mxu0 0.0
  %1074 = vmatpush1.msra.mxu0 0.0
  %1075 = vmatprep.subr.mxu0 0.0
  %1076 = vmatpush1.msra.mxu0 0.0
  %1077 = vmatprep.subr.mxu0 0.0
  %1078 = vmatpush1.msra.mxu0 0.0
  %1079 = vmatprep.subr.mxu0 0.0
  %1080 = vmatpush1.msra.mxu0 0.0
  %1081 = vmatprep.subr.mxu0 0.0
  %1082 = vmatpush1.msra.mxu0 0.0
  %1083 = vmatprep.subr.mxu0 0.0
  %1084 = vmatpush1.msra.mxu0 0.0
  %1085 = vmatprep.subr.mxu0 0.0
  %1086 = vmatpush1.msra.mxu0 0.0
  %1087 = vmatprep.subr.mxu0 0.0
  %1088 = vmatpush1.msra.mxu0 0.0
  %1089 = vmatprep.subr.mxu0 0.0
  %1090 = vmatpush1.msra.mxu0 0.0
  %1091 = vmatprep.subr.mxu0 0.0
  %1092 = vmatpush1.msra.mxu0 0.0
  %1093 = vmatprep.subr.mxu0 0.0
  %1094 = vmatpush1.msra.mxu0 0.0
  %1095 = vmatprep.subr.mxu0 0.0
  %1096 = vmatpush1.msra.mxu0 0.0
  %1097 = vmatprep.subr.mxu0 0.0
  %1098 = vmatpush1.msra.mxu0 0.0
  %1099 = vmatprep.subr.mxu0 0.0
  %1100 = vmatpush1.msra.mxu0 0.0
  %1101 = vmatprep.subr.mxu0 0.0
  %1102 = vmatpush1.msra.mxu0 0.0
  %1103 = vmatprep.mubr.f32.mxu0 0.0
  %1104 = vmatmul.mubr.f32.gmra.mrb[0].mxu0 %v1032
  %v1105 = vpop.f32.mrb[0].mxu0
  %v1106 = vadd.f32 0.0, %v1105
  %v1107 = vpop.f32.mrb[0].mxu0
  %1108 = vmatprep.mubr.f32.mxu0 0.0
  %1109 = vmatmul.mubr.f32.gmra.mrb[0].mxu0 %v1035
  %v1110 = vpop.f32.mrb[0].mxu0
  %v1111 = vadd.f32 0.0, %v1110
  %v1112 = vpop.f32.mrb[0].mxu0
  %1113 = vdwg.mxu0
  %s1114 = scalar_lea.vmem %s2, 32
  %v1115 = vld [vmem:[%s1114] sm:$0xff]
  %v1116 = vld [vmem:[%s1114 + $0x8] sm:$0xff]
  %v1118 = vsel %vm347, %v1106, 0
  %v1121 = vsel %vm347, %v1111, 0
  %1123 = vmatprep.subr.mxu0 0.0
  %1124 = vmatpush1.msra.mxu0 %v1115
  %1125 = vmatprep.subr.mxu0 0.0
  %1126 = vmatpush1.msra.mxu0 %v1116
  %1127 = vmatprep.subr.mxu0 0.0
  %1128 = vmatpush1.msra.mxu0 0.0
  %1129 = vmatprep.subr.mxu0 0.0
  %1130 = vmatpush1.msra.mxu0 0.0
  %1131 = vmatprep.subr.mxu0 0.0
  %1132 = vmatpush1.msra.mxu0 0.0
  %1133 = vmatprep.subr.mxu0 0.0
  %1134 = vmatpush1.msra.mxu0 0.0
  %1135 = vmatprep.subr.mxu0 0.0
  %1136 = vmatpush1.msra.mxu0 0.0
  %1137 = vmatprep.subr.mxu0 0.0
  %1138 = vmatpush1.msra.mxu0 0.0
  %1139 = vmatprep.subr.mxu0 0.0
  %1140 = vmatpush1.msra.mxu0 0.0
  %1141 = vmatprep.subr.mxu0 0.0
  %1142 = vmatpush1.msra.mxu0 0.0
  %1143 = vmatprep.subr.mxu0 0.0
  %1144 = vmatpush1.msra.mxu0 0.0
  %1145 = vmatprep.subr.mxu0 0.0
  %1146 = vmatpush1.msra.mxu0 0.0
  %1147 = vmatprep.subr.mxu0 0.0
  %1148 = vmatpush1.msra.mxu0 0.0
  %1149 = vmatprep.subr.mxu0 0.0
  %1150 = vmatpush1.msra.mxu0 0.0
  %1151 = vmatprep.subr.mxu0 0.0
  %1152 = vmatpush1.msra.mxu0 0.0
  %1153 = vmatprep.subr.mxu0 0.0
  %1154 = vmatpush1.msra.mxu0 0.0
  %1155 = vmatprep.subr.mxu0 0.0
  %1156 = vmatpush1.msra.mxu0 0.0
  %1157 = vmatprep.subr.mxu0 0.0
  %1158 = vmatpush1.msra.mxu0 0.0
  %1159 = vmatprep.subr.mxu0 0.0
  %1160 = vmatpush1.msra.mxu0 0.0
  %1161 = vmatprep.subr.mxu0 0.0
  %1162 = vmatpush1.msra.mxu0 0.0
  %1163 = vmatprep.subr.mxu0 0.0
  %1164 = vmatpush1.msra.mxu0 0.0
  %1165 = vmatprep.subr.mxu0 0.0
  %1166 = vmatpush1.msra.mxu0 0.0
  %1167 = vmatprep.subr.mxu0 0.0
  %1168 = vmatpush1.msra.mxu0 0.0
  %1169 = vmatprep.subr.mxu0 0.0
  %1170 = vmatpush1.msra.mxu0 0.0
  %1171 = vmatprep.subr.mxu0 0.0
  %1172 = vmatpush1.msra.mxu0 0.0
  %1173 = vmatprep.subr.mxu0 0.0
  %1174 = vmatpush1.msra.mxu0 0.0
  %1175 = vmatprep.subr.mxu0 0.0
  %1176 = vmatpush1.msra.mxu0 0.0
  %1177 = vmatprep.subr.mxu0 0.0
  %1178 = vmatpush1.msra.mxu0 0.0
  %1179 = vmatprep.subr.mxu0 0.0
  %1180 = vmatpush1.msra.mxu0 0.0
  %1181 = vmatprep.subr.mxu0 0.0
  %1182 = vmatpush1.msra.mxu0 0.0
  %1183 = vmatprep.subr.mxu0 0.0
  %1184 = vmatpush1.msra.mxu0 0.0
  %1185 = vmatprep.subr.mxu0 0.0
  %1186 = vmatpush1.msra.mxu0 0.0
  %1187 = vmatprep.mubr.f32.mxu0 0.0
  %1188 = vmatmul.mubr.f32.gmra.mrb[0].mxu0 %v1118
  %v1189 = vpop.f32.mrb[0].mxu0
  %v1190 = vadd.f32 0.0, %v1189
  %v1191 = vpop.f32.mrb[0].mxu0
  %1192 = vmatprep.mubr.f32.mxu0 0.0
  %1193 = vmatmul.mubr.f32.gmra.mrb[0].mxu0 %v1121
  %v1194 = vpop.f32.mrb[0].mxu0
  %v1195 = vadd.f32 0.0, %v1194
  %v1196 = vpop.f32.mrb[0].mxu0
  %1197 = vdwg.mxu0
  %v1198 = vadd.f32 %v905, %v1190
  %v1199 = vadd.f32 %v910, %v1195
  %1200 = vrot.lane.b32.xlu0 %v112, 80
  %v1201 = vpop.permute.xlu0 %1200
  %1202 = vrot.lane.b32.xlu0 %v117, 80
  %v1203 = vpop.permute.xlu0 %1202
  %1204 = vrot.lane.b32.xlu0 %v222, 80
  %v1205 = vpop.permute.xlu0 %1204
  %1206 = vrot.lane.b32.xlu0 %v227, 80
  %v1207 = vpop.permute.xlu0 %1206
  %v1208 = vsel %vm347, %v1201, 0
  %v1210 = vsel %vm347, %v1203, 0
  %v1212 = vsel %vm347, %v1205, 0
  %v1214 = vsel %vm347, %v1207, 0
  %1216 = vmatprep.subr.mxu0 0.0
  %1217 = vmatpush1.xpose.msra.mxu0 %v1212
  %1218 = vmatprep.subr.mxu0 0.0
  %1219 = vmatpush1.xpose.msra.mxu0 %v1214
  %1220 = vmatprep.subr.mxu0 0.0
  %1221 = vmatpush1.xpose.msra.mxu0 0.0
  %1222 = vmatprep.subr.mxu0 0.0
  %1223 = vmatpush1.xpose.msra.mxu0 0.0
  %1224 = vmatprep.subr.mxu0 0.0
  %1225 = vmatpush1.xpose.msra.mxu0 0.0
  %1226 = vmatprep.subr.mxu0 0.0
  %1227 = vmatpush1.xpose.msra.mxu0 0.0
  %1228 = vmatprep.subr.mxu0 0.0
  %1229 = vmatpush1.xpose.msra.mxu0 0.0
  %1230 = vmatprep.subr.mxu0 0.0
  %1231 = vmatpush1.xpose.msra.mxu0 0.0
  %1232 = vmatprep.subr.mxu0 0.0
  %1233 = vmatpush1.xpose.msra.mxu0 0.0
  %1234 = vmatprep.subr.mxu0 0.0
  %1235 = vmatpush1.xpose.msra.mxu0 0.0
  %1236 = vmatprep.subr.mxu0 0.0
  %1237 = vmatpush1.xpose.msra.mxu0 0.0
  %1238 = vmatprep.subr.mxu0 0.0
  %1239 = vmatpush1.xpose.msra.mxu0 0.0
  %1240 = vmatprep.subr.mxu0 0.0
  %1241 = vmatpush1.xpose.msra.mxu0 0.0
  %1242 = vmatprep.subr.mxu0 0.0
  %1243 = vmatpush1.xpose.msra.mxu0 0.0
  %1244 = vmatprep.subr.mxu0 0.0
  %1245 = vmatpush1.xpose.msra.mxu0 0.0
  %1246 = vmatprep.subr.mxu0 0.0
  %1247 = vmatpush1.xpose.msra.mxu0 0.0
  %1248 = vmatprep.subr.mxu0 0.0
  %1249 = vmatpush1.xpose.msra.mxu0 0.0
  %1250 = vmatprep.subr.mxu0 0.0
  %1251 = vmatpush1.xpose.msra.mxu0 0.0
  %1252 = vmatprep.subr.mxu0 0.0
  %1253 = vmatpush1.xpose.msra.mxu0 0.0
  %1254 = vmatprep.subr.mxu0 0.0
  %1255 = vmatpush1.xpose.msra.mxu0 0.0
  %1256 = vmatprep.subr.mxu0 0.0
  %1257 = vmatpush1.xpose.msra.mxu0 0.0
  %1258 = vmatprep.subr.mxu0 0.0
  %1259 = vmatpush1.xpose.msra.mxu0 0.0
  %1260 = vmatprep.subr.mxu0 0.0
  %1261 = vmatpush1.xpose.msra.mxu0 0.0
  %1262 = vmatprep.subr.mxu0 0.0
  %1263 = vmatpush1.xpose.msra.mxu0 0.0
  %1264 = vmatprep.subr.mxu0 0.0
  %1265 = vmatpush1.xpose.msra.mxu0 0.0
  %1266 = vmatprep.subr.mxu0 0.0
  %1267 = vmatpush1.xpose.msra.mxu0 0.0
  %1268 = vmatprep.subr.mxu0 0.0
  %1269 = vmatpush1.xpose.msra.mxu0 0.0
  %1270 = vmatprep.subr.mxu0 0.0
  %1271 = vmatpush1.xpose.msra.mxu0 0.0
  %1272 = vmatprep.subr.mxu0 0.0
  %1273 = vmatpush1.xpose.msra.mxu0 0.0
  %1274 = vmatprep.subr.mxu0 0.0
  %1275 = vmatpush1.xpose.msra.mxu0 0.0
  %1276 = vmatprep.subr.mxu0 0.0
  %1277 = vmatpush1.xpose.msra.mxu0 0.0
  %1278 = vmatprep.subr.mxu0 0.0
  %1279 = vmatpush1.xpose.msra.mxu0 0.0
  %1280 = vmatprep.mubr.f32.mxu0 0.0
  %1281 = vmatmul.mubr.f32.gmra.mrb[0].mxu0 %v1208
  %v1282 = vpop.f32.mrb[0].mxu0
  %v1283 = vadd.f32 0.0, %v1282
  %v1284 = vpop.f32.mrb[0].mxu0
  %1285 = vmatprep.mubr.f32.mxu0 0.0
  %1286 = vmatmul.mubr.f32.gmra.mrb[0].mxu0 %v1210
  %v1287 = vpop.f32.mrb[0].mxu0
  %v1288 = vadd.f32 0.0, %v1287
  %v1289 = vpop.f32.mrb[0].mxu0
  %1290 = vdwg.mxu0
  %v1291 = vsel %vm435, %v1283, -inf
  %1292 = vmax.xlane.f32.xlu0 %v1291
  %v1293 = vpop.xlane.xlu0 %1292
  %v1294 = vsel %vm439, %v1288, -inf
  %1295 = vmax.xlane.f32.xlu0 %v1294
  %v1296 = vpop.xlane.xlu0 %1295
  %v1297 = vsub.f32 %v1283, %v1293
  %v1298 = vsub.f32 %v1288, %v1296
  %v1299 = vmul.f32 %v1297, 1.442695
  %v1300 = vpow.pop %v1299
  %v1301 = vmul.f32 %v1298, 1.442695
  %v1302 = vpow.pop %v1301
  %v1303 = vsel %vm435, %v1300, 0.0
  %1304 = vadd.xlane.f32.xlu0 %v1303
  %v1305 = vpop.xlane.xlu0 %1304
  %v1306 = vsel %vm439, %v1302, 0.0
  %1307 = vadd.xlane.f32.xlu0 %v1306
  %v1308 = vpop.xlane.xlu0 %1307
  %v1309 = vrcp.pop %v1305
  %v1310 = vmul.f32 %v1300, %v1309
  %v1311 = vrcp.pop %v1308
  %v1312 = vmul.f32 %v1302, %v1311
  %1313 = vrot.lane.b32.xlu0 %v332, 80
  %v1314 = vpop.permute.xlu0 %1313
  %1315 = vrot.lane.b32.xlu0 %v337, 80
  %v1316 = vpop.permute.xlu0 %1315
  %v1319 = vsel %vm435, %v1310, 0
  %v1322 = vsel %vm435, %v1312, 0
  %v1324 = vsel %vm465, %v1316, 0
  %1326 = vmatprep.subr.mxu0 0.0
  %1327 = vmatpush1.msra.mxu0 %v1314
  %1328 = vmatprep.subr.mxu0 0.0
  %1329 = vmatpush1.msra.mxu0 %v1324
  %1330 = vmatprep.subr.mxu0 0.0
  %1331 = vmatpush1.msra.mxu0 0.0
  %1332 = vmatprep.subr.mxu0 0.0
  %1333 = vmatpush1.msra.mxu0 0.0
  %1334 = vmatprep.subr.mxu0 0.0
  %1335 = vmatpush1.msra.mxu0 0.0
  %1336 = vmatprep.subr.mxu0 0.0
  %1337 = vmatpush1.msra.mxu0 0.0
  %1338 = vmatprep.subr.mxu0 0.0
  %1339 = vmatpush1.msra.mxu0 0.0
  %1340 = vmatprep.subr.mxu0 0.0
  %1341 = vmatpush1.msra.mxu0 0.0
  %1342 = vmatprep.subr.mxu0 0.0
  %1343 = vmatpush1.msra.mxu0 0.0
  %1344 = vmatprep.subr.mxu0 0.0
  %1345 = vmatpush1.msra.mxu0 0.0
  %1346 = vmatprep.subr.mxu0 0.0
  %1347 = vmatpush1.msra.mxu0 0.0
  %1348 = vmatprep.subr.mxu0 0.0
  %1349 = vmatpush1.msra.mxu0 0.0
  %1350 = vmatprep.subr.mxu0 0.0
  %1351 = vmatpush1.msra.mxu0 0.0
  %1352 = vmatprep.subr.mxu0 0.0
  %1353 = vmatpush1.msra.mxu0 0.0
  %1354 = vmatprep.subr.mxu0 0.0
  %1355 = vmatpush1.msra.mxu0 0.0
  %1356 = vmatprep.subr.mxu0 0.0
  %1357 = vmatpush1.msra.mxu0 0.0
  %1358 = vmatprep.subr.mxu0 0.0
  %1359 = vmatpush1.msra.mxu0 0.0
  %1360 = vmatprep.subr.mxu0 0.0
  %1361 = vmatpush1.msra.mxu0 0.0
  %1362 = vmatprep.subr.mxu0 0.0
  %1363 = vmatpush1.msra.mxu0 0.0
  %1364 = vmatprep.subr.mxu0 0.0
  %1365 = vmatpush1.msra.mxu0 0.0
  %1366 = vmatprep.subr.mxu0 0.0
  %1367 = vmatpush1.msra.mxu0 0.0
  %1368 = vmatprep.subr.mxu0 0.0
  %1369 = vmatpush1.msra.mxu0 0.0
  %1370 = vmatprep.subr.mxu0 0.0
  %1371 = vmatpush1.msra.mxu0 0.0
  %1372 = vmatprep.subr.mxu0 0.0
  %1373 = vmatpush1.msra.mxu0 0.0
  %1374 = vmatprep.subr.mxu0 0.0
  %1375 = vmatpush1.msra.mxu0 0.0
  %1376 = vmatprep.subr.mxu0 0.0
  %1377 = vmatpush1.msra.mxu0 0.0
  %1378 = vmatprep.subr.mxu0 0.0
  %1379 = vmatpush1.msra.mxu0 0.0
  %1380 = vmatprep.subr.mxu0 0.0
  %1381 = vmatpush1.msra.mxu0 0.0
  %1382 = vmatprep.subr.mxu0 0.0
  %1383 = vmatpush1.msra.mxu0 0.0
  %1384 = vmatprep.subr.mxu0 0.0
  %1385 = vmatpush1.msra.mxu0 0.0
  %1386 = vmatprep.subr.mxu0 0.0
  %1387 = vmatpush1.msra.mxu0 0.0
  %1388 = vmatprep.subr.mxu0 0.0
  %1389 = vmatpush1.msra.mxu0 0.0
  %1390 = vmatprep.mubr.f32.mxu0 0.0
  %1391 = vmatmul.mubr.f32.gmra.mrb[0].mxu0 %v1319
  %v1392 = vpop.f32.mrb[0].mxu0
  %v1393 = vadd.f32 0.0, %v1392
  %v1394 = vpop.f32.mrb[0].mxu0
  %1395 = vmatprep.mubr.f32.mxu0 0.0
  %1396 = vmatmul.mubr.f32.gmra.mrb[0].mxu0 %v1322
  %v1397 = vpop.f32.mrb[0].mxu0
  %v1398 = vadd.f32 0.0, %v1397
  %v1399 = vpop.f32.mrb[0].mxu0
  %1400 = vdwg.mxu0
  %s1401 = scalar_lea.vmem %s2, 48
  %v1402 = vld [vmem:[%s1401] sm:$0xff]
  %v1403 = vld [vmem:[%s1401 + $0x8] sm:$0xff]
  %v1405 = vsel %vm347, %v1393, 0
  %v1408 = vsel %vm347, %v1398, 0
  %1410 = vmatprep.subr.mxu0 0.0
  %1411 = vmatpush1.msra.mxu0 %v1402
  %1412 = vmatprep.subr.mxu0 0.0
  %1413 = vmatpush1.msra.mxu0 %v1403
  %1414 = vmatprep.subr.mxu0 0.0
  %1415 = vmatpush1.msra.mxu0 0.0
  %1416 = vmatprep.subr.mxu0 0.0
  %1417 = vmatpush1.msra.mxu0 0.0
  %1418 = vmatprep.subr.mxu0 0.0
  %1419 = vmatpush1.msra.mxu0 0.0
  %1420 = vmatprep.subr.mxu0 0.0
  %1421 = vmatpush1.msra.mxu0 0.0
  %1422 = vmatprep.subr.mxu0 0.0
  %1423 = vmatpush1.msra.mxu0 0.0
  %1424 = vmatprep.subr.mxu0 0.0
  %1425 = vmatpush1.msra.mxu0 0.0
  %1426 = vmatprep.subr.mxu0 0.0
  %1427 = vmatpush1.msra.mxu0 0.0
  %1428 = vmatprep.subr.mxu0 0.0
  %1429 = vmatpush1.msra.mxu0 0.0
  %1430 = vmatprep.subr.mxu0 0.0
  %1431 = vmatpush1.msra.mxu0 0.0
  %1432 = vmatprep.subr.mxu0 0.0
  %1433 = vmatpush1.msra.mxu0 0.0
  %1434 = vmatprep.subr.mxu0 0.0
  %1435 = vmatpush1.msra.mxu0 0.0
  %1436 = vmatprep.subr.mxu0 0.0
  %1437 = vmatpush1.msra.mxu0 0.0
  %1438 = vmatprep.subr.mxu0 0.0
  %1439 = vmatpush1.msra.mxu0 0.0
  %1440 = vmatprep.subr.mxu0 0.0
  %1441 = vmatpush1.msra.mxu0 0.0
  %1442 = vmatprep.subr.mxu0 0.0
  %1443 = vmatpush1.msra.mxu0 0.0
  %1444 = vmatprep.subr.mxu0 0.0
  %1445 = vmatpush1.msra.mxu0 0.0
  %1446 = vmatprep.subr.mxu0 0.0
  %1447 = vmatpush1.msra.mxu0 0.0
  %1448 = vmatprep.subr.mxu0 0.0
  %1449 = vmatpush1.msra.mxu0 0.0
  %1450 = vmatprep.subr.mxu0 0.0
  %1451 = vmatpush1.msra.mxu0 0.0
  %1452 = vmatprep.subr.mxu0 0.0
  %1453 = vmatpush1.msra.mxu0 0.0
  %1454 = vmatprep.subr.mxu0 0.0
  %1455 = vmatpush1.msra.mxu0 0.0
  %1456 = vmatprep.subr.mxu0 0.0
  %1457 = vmatpush1.msra.mxu0 0.0
  %1458 = vmatprep.subr.mxu0 0.0
  %1459 = vmatpush1.msra.mxu0 0.0
  %1460 = vmatprep.subr.mxu0 0.0
  %1461 = vmatpush1.msra.mxu0 0.0
  %1462 = vmatprep.subr.mxu0 0.0
  %1463 = vmatpush1.msra.mxu0 0.0
  %1464 = vmatprep.subr.mxu0 0.0
  %1465 = vmatpush1.msra.mxu0 0.0
  %1466 = vmatprep.subr.mxu0 0.0
  %1467 = vmatpush1.msra.mxu0 0.0
  %1468 = vmatprep.subr.mxu0 0.0
  %1469 = vmatpush1.msra.mxu0 0.0
  %1470 = vmatprep.subr.mxu0 0.0
  %1471 = vmatpush1.msra.mxu0 0.0
  %1472 = vmatprep.subr.mxu0 0.0
  %1473 = vmatpush1.msra.mxu0 0.0
  %1474 = vmatprep.mubr.f32.mxu0 0.0
  %1475 = vmatmul.mubr.f32.gmra.mrb[0].mxu0 %v1405
  %v1476 = vpop.f32.mrb[0].mxu0
  %v1477 = vadd.f32 0.0, %v1476
  %v1478 = vpop.f32.mrb[0].mxu0
  %1479 = vmatprep.mubr.f32.mxu0 0.0
  %1480 = vmatmul.mubr.f32.gmra.mrb[0].mxu0 %v1408
  %v1481 = vpop.f32.mrb[0].mxu0
  %v1482 = vadd.f32 0.0, %v1481
  %v1483 = vpop.f32.mrb[0].mxu0
  %1484 = vdwg.mxu0
  %v1485 = vadd.f32 %v1198, %v1477
  %v1486 = vadd.f32 %v1199, %v1482
  %v1488 = vlaneseq
  %v1489 = vshrl.u32 %v1488, 7
  %v1490 = vsub.s32 0, %v1489
  %v1491 = vrot.slane %v346, %v1490
  %v1493 = vadd.f32 %v1485, %v1491
  %v1494 = vadd.f32 %v1486, %v1491
  %1495 = vst.msk [vmem:[%s4] sm:$0xff] %vm35, %v1493
  %vm1496 = vcmask 517120
  %1497 = vst.msk [vmem:[%s4 + $0x8] sm:$0x3] %vm1496, %v1494
  %vm1499 = vcmask 1045504
  %v1500 = vrot.slane %v117, 2
  %v1501 = vrot.slane %v122, 2
  %v1502 = vsel %vm1499, %v1500, %v1501
  %v1504 = vrot.slane %v227, 2
  %v1505 = vrot.slane %v232, 2
  %v1506 = vsel %vm1499, %v1504, %v1505
  %v1507 = vsel %vm347, %v1502, 0
  %v1509 = vsel %vm347, %v1501, 0
  %v1511 = vsel %vm347, %v1506, 0
  %v1513 = vsel %vm347, %v1505, 0
  %1515 = vmatprep.subr.mxu0 0.0
  %1516 = vmatpush1.xpose.msra.mxu0 %v1511
  %1517 = vmatprep.subr.mxu0 0.0
  %1518 = vmatpush1.xpose.msra.mxu0 %v1513
  %1519 = vmatprep.subr.mxu0 0.0
  %1520 = vmatpush1.xpose.msra.mxu0 0.0
  %1521 = vmatprep.subr.mxu0 0.0
  %1522 = vmatpush1.xpose.msra.mxu0 0.0
  %1523 = vmatprep.subr.mxu0 0.0
  %1524 = vmatpush1.xpose.msra.mxu0 0.0
  %1525 = vmatprep.subr.mxu0 0.0
  %1526 = vmatpush1.xpose.msra.mxu0 0.0
  %1527 = vmatprep.subr.mxu0 0.0
  %1528 = vmatpush1.xpose.msra.mxu0 0.0
  %1529 = vmatprep.subr.mxu0 0.0
  %1530 = vmatpush1.xpose.msra.mxu0 0.0
  %1531 = vmatprep.subr.mxu0 0.0
  %1532 = vmatpush1.xpose.msra.mxu0 0.0
  %1533 = vmatprep.subr.mxu0 0.0
  %1534 = vmatpush1.xpose.msra.mxu0 0.0
  %1535 = vmatprep.subr.mxu0 0.0
  %1536 = vmatpush1.xpose.msra.mxu0 0.0
  %1537 = vmatprep.subr.mxu0 0.0
  %1538 = vmatpush1.xpose.msra.mxu0 0.0
  %1539 = vmatprep.subr.mxu0 0.0
  %1540 = vmatpush1.xpose.msra.mxu0 0.0
  %1541 = vmatprep.subr.mxu0 0.0
  %1542 = vmatpush1.xpose.msra.mxu0 0.0
  %1543 = vmatprep.subr.mxu0 0.0
  %1544 = vmatpush1.xpose.msra.mxu0 0.0
  %1545 = vmatprep.subr.mxu0 0.0
  %1546 = vmatpush1.xpose.msra.mxu0 0.0
  %1547 = vmatprep.subr.mxu0 0.0
  %1548 = vmatpush1.xpose.msra.mxu0 0.0
  %1549 = vmatprep.subr.mxu0 0.0
  %1550 = vmatpush1.xpose.msra.mxu0 0.0
  %1551 = vmatprep.subr.mxu0 0.0
  %1552 = vmatpush1.xpose.msra.mxu0 0.0
  %1553 = vmatprep.subr.mxu0 0.0
  %1554 = vmatpush1.xpose.msra.mxu0 0.0
  %1555 = vmatprep.subr.mxu0 0.0
  %1556 = vmatpush1.xpose.msra.mxu0 0.0
  %1557 = vmatprep.subr.mxu0 0.0
  %1558 = vmatpush1.xpose.msra.mxu0 0.0
  %1559 = vmatprep.subr.mxu0 0.0
  %1560 = vmatpush1.xpose.msra.mxu0 0.0
  %1561 = vmatprep.subr.mxu0 0.0
  %1562 = vmatpush1.xpose.msra.mxu0 0.0
  %1563 = vmatprep.subr.mxu0 0.0
  %1564 = vmatpush1.xpose.msra.mxu0 0.0
  %1565 = vmatprep.subr.mxu0 0.0
  %1566 = vmatpush1.xpose.msra.mxu0 0.0
  %1567 = vmatprep.subr.mxu0 0.0
  %1568 = vmatpush1.xpose.msra.mxu0 0.0
  %1569 = vmatprep.subr.mxu0 0.0
  %1570 = vmatpush1.xpose.msra.mxu0 0.0
  %1571 = vmatprep.subr.mxu0 0.0
  %1572 = vmatpush1.xpose.msra.mxu0 0.0
  %1573 = vmatprep.subr.mxu0 0.0
  %1574 = vmatpush1.xpose.msra.mxu0 0.0
  %1575 = vmatprep.subr.mxu0 0.0
  %1576 = vmatpush1.xpose.msra.mxu0 0.0
  %1577 = vmatprep.subr.mxu0 0.0
  %1578 = vmatpush1.xpose.msra.mxu0 0.0
  %1579 = vmatprep.mubr.f32.mxu0 0.0
  %1580 = vmatmul.mubr.f32.gmra.mrb[0].mxu0 %v1507
  %v1581 = vpop.f32.mrb[0].mxu0
  %v1582 = vadd.f32 0.0, %v1581
  %v1583 = vpop.f32.mrb[0].mxu0
  %1584 = vmatprep.mubr.f32.mxu0 0.0
  %1585 = vmatmul.mubr.f32.gmra.mrb[0].mxu0 %v1509
  %v1586 = vpop.f32.mrb[0].mxu0
  %v1587 = vadd.f32 0.0, %v1586
  %v1588 = vpop.f32.mrb[0].mxu0
  %1589 = vdwg.mxu0
  %v1590 = vsel %vm435, %v1582, -inf
  %1591 = vmax.xlane.f32.xlu0 %v1590
  %v1592 = vpop.xlane.xlu0 %1591
  %v1593 = vsel %vm439, %v1587, -inf
  %1594 = vmax.xlane.f32.xlu0 %v1593
  %v1595 = vpop.xlane.xlu0 %1594
  %v1596 = vsub.f32 %v1582, %v1592
  %v1597 = vsub.f32 %v1587, %v1595
  %v1598 = vmul.f32 %v1596, 1.442695
  %v1599 = vpow.pop %v1598
  %v1600 = vmul.f32 %v1597, 1.442695
  %v1601 = vpow.pop %v1600
  %v1602 = vsel %vm435, %v1599, 0.0
  %1603 = vadd.xlane.f32.xlu0 %v1602
  %v1604 = vpop.xlane.xlu0 %1603
  %v1605 = vsel %vm439, %v1601, 0.0
  %1606 = vadd.xlane.f32.xlu0 %v1605
  %v1607 = vpop.xlane.xlu0 %1606
  %v1608 = vrcp.pop %v1604
  %v1609 = vmul.f32 %v1599, %v1608
  %v1610 = vrcp.pop %v1607
  %v1611 = vmul.f32 %v1601, %v1610
  %v1613 = vrot.slane %v337, 2
  %v1614 = vrot.slane %v342, 2
  %v1615 = vsel %vm1499, %v1613, %v1614
  %v1618 = vsel %vm435, %v1609, 0
  %v1621 = vsel %vm435, %v1611, 0
  %v1623 = vsel %vm465, %v1614, 0
  %1625 = vmatprep.subr.mxu0 0.0
  %1626 = vmatpush1.msra.mxu0 %v1615
  %1627 = vmatprep.subr.mxu0 0.0
  %1628 = vmatpush1.msra.mxu0 %v1623
  %1629 = vmatprep.subr.mxu0 0.0
  %1630 = vmatpush1.msra.mxu0 0.0
  %1631 = vmatprep.subr.mxu0 0.0
  %1632 = vmatpush1.msra.mxu0 0.0
  %1633 = vmatprep.subr.mxu0 0.0
  %1634 = vmatpush1.msra.mxu0 0.0
  %1635 = vmatprep.subr.mxu0 0.0
  %1636 = vmatpush1.msra.mxu0 0.0
  %1637 = vmatprep.subr.mxu0 0.0
  %1638 = vmatpush1.msra.mxu0 0.0
  %1639 = vmatprep.subr.mxu0 0.0
  %1640 = vmatpush1.msra.mxu0 0.0
  %1641 = vmatprep.subr.mxu0 0.0
  %1642 = vmatpush1.msra.mxu0 0.0
  %1643 = vmatprep.subr.mxu0 0.0
  %1644 = vmatpush1.msra.mxu0 0.0
  %1645 = vmatprep.subr.mxu0 0.0
  %1646 = vmatpush1.msra.mxu0 0.0
  %1647 = vmatprep.subr.mxu0 0.0
  %1648 = vmatpush1.msra.mxu0 0.0
  %1649 = vmatprep.subr.mxu0 0.0
  %1650 = vmatpush1.msra.mxu0 0.0
  %1651 = vmatprep.subr.mxu0 0.0
  %1652 = vmatpush1.msra.mxu0 0.0
  %1653 = vmatprep.subr.mxu0 0.0
  %1654 = vmatpush1.msra.mxu0 0.0
  %1655 = vmatprep.subr.mxu0 0.0
  %1656 = vmatpush1.msra.mxu0 0.0
  %1657 = vmatprep.subr.mxu0 0.0
  %1658 = vmatpush1.msra.mxu0 0.0
  %1659 = vmatprep.subr.mxu0 0.0
  %1660 = vmatpush1.msra.mxu0 0.0
  %1661 = vmatprep.subr.mxu0 0.0
  %1662 = vmatpush1.msra.mxu0 0.0
  %1663 = vmatprep.subr.mxu0 0.0
  %1664 = vmatpush1.msra.mxu0 0.0
  %1665 = vmatprep.subr.mxu0 0.0
  %1666 = vmatpush1.msra.mxu0 0.0
  %1667 = vmatprep.subr.mxu0 0.0
  %1668 = vmatpush1.msra.mxu0 0.0
  %1669 = vmatprep.subr.mxu0 0.0
  %1670 = vmatpush1.msra.mxu0 0.0
  %1671 = vmatprep.subr.mxu0 0.0
  %1672 = vmatpush1.msra.mxu0 0.0
  %1673 = vmatprep.subr.mxu0 0.0
  %1674 = vmatpush1.msra.mxu0 0.0
  %1675 = vmatprep.subr.mxu0 0.0
  %1676 = vmatpush1.msra.mxu0 0.0
  %1677 = vmatprep.subr.mxu0 0.0
  %1678 = vmatpush1.msra.mxu0 0.0
  %1679 = vmatprep.subr.mxu0 0.0
  %1680 = vmatpush1.msra.mxu0 0.0
  %1681 = vmatprep.subr.mxu0 0.0
  %1682 = vmatpush1.msra.mxu0 0.0
  %1683 = vmatprep.subr.mxu0 0.0
  %1684 = vmatpush1.msra.mxu0 0.0
  %1685 = vmatprep.subr.mxu0 0.0
  %1686 = vmatpush1.msra.mxu0 0.0
  %1687 = vmatprep.subr.mxu0 0.0
  %1688 = vmatpush1.msra.mxu0 0.0
  %1689 = vmatprep.mubr.f32.mxu0 0.0
  %1690 = vmatmul.mubr.f32.gmra.mrb[0].mxu0 %v1618
  %v1691 = vpop.f32.mrb[0].mxu0
  %v1692 = vadd.f32 0.0, %v1691
  %v1693 = vpop.f32.mrb[0].mxu0
  %1694 = vmatprep.mubr.f32.mxu0 0.0
  %1695 = vmatmul.mubr.f32.gmra.mrb[0].mxu0 %v1621
  %v1696 = vpop.f32.mrb[0].mxu0
  %v1697 = vadd.f32 0.0, %v1696
  %v1698 = vpop.f32.mrb[0].mxu0
  %1699 = vdwg.mxu0
  %v1700 = vld [vmem:[%s2] sm:$0xff]
  %v1701 = vld [vmem:[%s2 + $0x8] sm:$0xff]
  %1702 = vrot.lane.b32.xlu0 %v1502, 112
  %v1703 = vpop.permute.xlu0 %1702
  %1704 = vrot.lane.b32.xlu0 %v1501, 112
  %v1705 = vpop.permute.xlu0 %1704
  %1706 = vrot.lane.b32.xlu0 %v1506, 112
  %v1707 = vpop.permute.xlu0 %1706
  %1708 = vrot.lane.b32.xlu0 %v1505, 112
  %v1709 = vpop.permute.xlu0 %1708
  %v1710 = vsel %vm347, %v1703, 0
  %v1712 = vsel %vm347, %v1705, 0
  %v1714 = vsel %vm347, %v1707, 0
  %v1716 = vsel %vm347, %v1709, 0
  %1718 = vmatprep.subr.mxu0 0.0
  %1719 = vmatpush1.xpose.msra.mxu0 %v1714
  %1720 = vmatprep.subr.mxu0 0.0
  %1721 = vmatpush1.xpose.msra.mxu0 %v1716
  %1722 = vmatprep.subr.mxu0 0.0
  %1723 = vmatpush1.xpose.msra.mxu0 0.0
  %1724 = vmatprep.subr.mxu0 0.0
  %1725 = vmatpush1.xpose.msra.mxu0 0.0
  %1726 = vmatprep.subr.mxu0 0.0
  %1727 = vmatpush1.xpose.msra.mxu0 0.0
  %1728 = vmatprep.subr.mxu0 0.0
  %1729 = vmatpush1.xpose.msra.mxu0 0.0
  %1730 = vmatprep.subr.mxu0 0.0
  %1731 = vmatpush1.xpose.msra.mxu0 0.0
  %1732 = vmatprep.subr.mxu0 0.0
  %1733 = vmatpush1.xpose.msra.mxu0 0.0
  %1734 = vmatprep.subr.mxu0 0.0
  %1735 = vmatpush1.xpose.msra.mxu0 0.0
  %1736 = vmatprep.subr.mxu0 0.0
  %1737 = vmatpush1.xpose.msra.mxu0 0.0
  %1738 = vmatprep.subr.mxu0 0.0
  %1739 = vmatpush1.xpose.msra.mxu0 0.0
  %1740 = vmatprep.subr.mxu0 0.0
  %1741 = vmatpush1.xpose.msra.mxu0 0.0
  %1742 = vmatprep.subr.mxu0 0.0
  %1743 = vmatpush1.xpose.msra.mxu0 0.0
  %1744 = vmatprep.subr.mxu0 0.0
  %1745 = vmatpush1.xpose.msra.mxu0 0.0
  %1746 = vmatprep.subr.mxu0 0.0
  %1747 = vmatpush1.xpose.msra.mxu0 0.0
  %1748 = vmatprep.subr.mxu0 0.0
  %1749 = vmatpush1.xpose.msra.mxu0 0.0
  %1750 = vmatprep.subr.mxu0 0.0
  %1751 = vmatpush1.xpose.msra.mxu0 0.0
  %1752 = vmatprep.subr.mxu0 0.0
  %1753 = vmatpush1.xpose.msra.mxu0 0.0
  %1754 = vmatprep.subr.mxu0 0.0
  %1755 = vmatpush1.xpose.msra.mxu0 0.0
  %1756 = vmatprep.subr.mxu0 0.0
  %1757 = vmatpush1.xpose.msra.mxu0 0.0
  %1758 = vmatprep.subr.mxu0 0.0
  %1759 = vmatpush1.xpose.msra.mxu0 0.0
  %1760 = vmatprep.subr.mxu0 0.0
  %1761 = vmatpush1.xpose.msra.mxu0 0.0
  %1762 = vmatprep.subr.mxu0 0.0
  %1763 = vmatpush1.xpose.msra.mxu0 0.0
  %1764 = vmatprep.subr.mxu0 0.0
  %1765 = vmatpush1.xpose.msra.mxu0 0.0
  %1766 = vmatprep.subr.mxu0 0.0
  %1767 = vmatpush1.xpose.msra.mxu0 0.0
  %1768 = vmatprep.subr.mxu0 0.0
  %1769 = vmatpush1.xpose.msra.mxu0 0.0
  %1770 = vmatprep.subr.mxu0 0.0
  %1771 = vmatpush1.xpose.msra.mxu0 0.0
  %1772 = vmatprep.subr.mxu0 0.0
  %1773 = vmatpush1.xpose.msra.mxu0 0.0
  %1774 = vmatprep.subr.mxu0 0.0
  %1775 = vmatpush1.xpose.msra.mxu0 0.0
  %1776 = vmatprep.subr.mxu0 0.0
  %1777 = vmatpush1.xpose.msra.mxu0 0.0
  %1778 = vmatprep.subr.mxu0 0.0
  %1779 = vmatpush1.xpose.msra.mxu0 0.0
  %1780 = vmatprep.subr.mxu0 0.0
  %1781 = vmatpush1.xpose.msra.mxu0 0.0
  %1782 = vmatprep.mubr.f32.mxu0 0.0
  %1783 = vmatmul.mubr.f32.gmra.mrb[0].mxu0 %v1710
  %v1784 = vpop.f32.mrb[0].mxu0
  %v1785 = vadd.f32 0.0, %v1784
  %v1786 = vpop.f32.mrb[0].mxu0
  %1787 = vmatprep.mubr.f32.mxu0 0.0
  %1788 = vmatmul.mubr.f32.gmra.mrb[0].mxu0 %v1712
  %v1789 = vpop.f32.mrb[0].mxu0
  %v1790 = vadd.f32 0.0, %v1789
  %v1791 = vpop.f32.mrb[0].mxu0
  %1792 = vdwg.mxu0
  %v1793 = vsel %vm435, %v1785, -inf
  %1794 = vmax.xlane.f32.xlu0 %v1793
  %v1795 = vpop.xlane.xlu0 %1794
  %v1796 = vsel %vm439, %v1790, -inf
  %1797 = vmax.xlane.f32.xlu0 %v1796
  %v1798 = vpop.xlane.xlu0 %1797
  %v1799 = vsub.f32 %v1785, %v1795
  %v1800 = vsub.f32 %v1790, %v1798
  %v1801 = vmul.f32 %v1799, 1.442695
  %v1802 = vpow.pop %v1801
  %v1803 = vmul.f32 %v1800, 1.442695
  %v1804 = vpow.pop %v1803
  %v1805 = vsel %vm435, %v1802, 0.0
  %1806 = vadd.xlane.f32.xlu0 %v1805
  %v1807 = vpop.xlane.xlu0 %1806
  %v1808 = vsel %vm439, %v1804, 0.0
  %1809 = vadd.xlane.f32.xlu0 %v1808
  %v1810 = vpop.xlane.xlu0 %1809
  %v1811 = vrcp.pop %v1807
  %v1812 = vmul.f32 %v1802, %v1811
  %v1813 = vrcp.pop %v1810
  %v1814 = vmul.f32 %v1804, %v1813
  %1815 = vrot.lane.b32.xlu0 %v1615, 112
  %v1816 = vpop.permute.xlu0 %1815
  %1817 = vrot.lane.b32.xlu0 %v1614, 112
  %v1818 = vpop.permute.xlu0 %1817
  %v1821 = vsel %vm435, %v1812, 0
  %v1824 = vsel %vm435, %v1814, 0
  %v1826 = vsel %vm465, %v1818, 0
  %1828 = vmatprep.subr.mxu0 0.0
  %1829 = vmatpush1.msra.mxu0 %v1816
  %1830 = vmatprep.subr.mxu0 0.0
  %1831 = vmatpush1.msra.mxu0 %v1826
  %1832 = vmatprep.subr.mxu0 0.0
  %1833 = vmatpush1.msra.mxu0 0.0
  %1834 = vmatprep.subr.mxu0 0.0
  %1835 = vmatpush1.msra.mxu0 0.0
  %1836 = vmatprep.subr.mxu0 0.0
  %1837 = vmatpush1.msra.mxu0 0.0
  %1838 = vmatprep.subr.mxu0 0.0
  %1839 = vmatpush1.msra.mxu0 0.0
  %1840 = vmatprep.subr.mxu0 0.0
  %1841 = vmatpush1.msra.mxu0 0.0
  %1842 = vmatprep.subr.mxu0 0.0
  %1843 = vmatpush1.msra.mxu0 0.0
  %1844 = vmatprep.subr.mxu0 0.0
  %1845 = vmatpush1.msra.mxu0 0.0
  %1846 = vmatprep.subr.mxu0 0.0
  %1847 = vmatpush1.msra.mxu0 0.0
  %1848 = vmatprep.subr.mxu0 0.0
  %1849 = vmatpush1.msra.mxu0 0.0
  %1850 = vmatprep.subr.mxu0 0.0
  %1851 = vmatpush1.msra.mxu0 0.0
  %1852 = vmatprep.subr.mxu0 0.0
  %1853 = vmatpush1.msra.mxu0 0.0
  %1854 = vmatprep.subr.mxu0 0.0
  %1855 = vmatpush1.msra.mxu0 0.0
  %1856 = vmatprep.subr.mxu0 0.0
  %1857 = vmatpush1.msra.mxu0 0.0
  %1858 = vmatprep.subr.mxu0 0.0
  %1859 = vmatpush1.msra.mxu0 0.0
  %1860 = vmatprep.subr.mxu0 0.0
  %1861 = vmatpush1.msra.mxu0 0.0
  %1862 = vmatprep.subr.mxu0 0.0
  %1863 = vmatpush1.msra.mxu0 0.0
  %1864 = vmatprep.subr.mxu0 0.0
  %1865 = vmatpush1.msra.mxu0 0.0
  %1866 = vmatprep.subr.mxu0 0.0
  %1867 = vmatpush1.msra.mxu0 0.0
  %1868 = vmatprep.subr.mxu0 0.0
  %1869 = vmatpush1.msra.mxu0 0.0
  %1870 = vmatprep.subr.mxu0 0.0
  %1871 = vmatpush1.msra.mxu0 0.0
  %1872 = vmatprep.subr.mxu0 0.0
  %1873 = vmatpush1.msra.mxu0 0.0
  %1874 = vmatprep.subr.mxu0 0.0
  %1875 = vmatpush1.msra.mxu0 0.0
  %1876 = vmatprep.subr.mxu0 0.0
  %1877 = vmatpush1.msra.mxu0 0.0
  %1878 = vmatprep.subr.mxu0 0.0
  %1879 = vmatpush1.msra.mxu0 0.0
  %1880 = vmatprep.subr.mxu0 0.0
  %1881 = vmatpush1.msra.mxu0 0.0
  %1882 = vmatprep.subr.mxu0 0.0
  %1883 = vmatpush1.msra.mxu0 0.0
  %1884 = vmatprep.subr.mxu0 0.0
  %1885 = vmatpush1.msra.mxu0 0.0
  %1886 = vmatprep.subr.mxu0 0.0
  %1887 = vmatpush1.msra.mxu0 0.0
  %1888 = vmatprep.subr.mxu0 0.0
  %1889 = vmatpush1.msra.mxu0 0.0
  %1890 = vmatprep.subr.mxu0 0.0
  %1891 = vmatpush1.msra.mxu0 0.0
  %1892 = vmatprep.mubr.f32.mxu0 0.0
  %1893 = vmatmul.mubr.f32.gmra.mrb[0].mxu0 %v1821
  %v1894 = vpop.f32.mrb[0].mxu0
  %v1895 = vadd.f32 0.0, %v1894
  %v1896 = vpop.f32.mrb[0].mxu0
  %1897 = vmatprep.mubr.f32.mxu0 0.0
  %1898 = vmatmul.mubr.f32.gmra.mrb[0].mxu0 %v1824
  %v1899 = vpop.f32.mrb[0].mxu0
  %v1900 = vadd.f32 0.0, %v1899
  %v1901 = vpop.f32.mrb[0].mxu0
  %1902 = vdwg.mxu0
  %v1903 = vld [vmem:[%s748] sm:$0xff]
  %v1904 = vld [vmem:[%s748 + $0x8] sm:$0xff]
  %v1906 = vsel %vm347, %v1895, 0
  %v1909 = vsel %vm347, %v1900, 0
  %1911 = vmatprep.subr.mxu0 0.0
  %1912 = vmatpush1.msra.mxu0 %v1903
  %1913 = vmatprep.subr.mxu0 0.0
  %1914 = vmatpush1.msra.mxu0 %v1904
  %1915 = vmatprep.subr.mxu0 0.0
  %1916 = vmatpush1.msra.mxu0 0.0
  %1917 = vmatprep.subr.mxu0 0.0
  %1918 = vmatpush1.msra.mxu0 0.0
  %1919 = vmatprep.subr.mxu0 0.0
  %1920 = vmatpush1.msra.mxu0 0.0
  %1921 = vmatprep.subr.mxu0 0.0
  %1922 = vmatpush1.msra.mxu0 0.0
  %1923 = vmatprep.subr.mxu0 0.0
  %1924 = vmatpush1.msra.mxu0 0.0
  %1925 = vmatprep.subr.mxu0 0.0
  %1926 = vmatpush1.msra.mxu0 0.0
  %1927 = vmatprep.subr.mxu0 0.0
  %1928 = vmatpush1.msra.mxu0 0.0
  %1929 = vmatprep.subr.mxu0 0.0
  %1930 = vmatpush1.msra.mxu0 0.0
  %1931 = vmatprep.subr.mxu0 0.0
  %1932 = vmatpush1.msra.mxu0 0.0
  %1933 = vmatprep.subr.mxu0 0.0
  %1934 = vmatpush1.msra.mxu0 0.0
  %1935 = vmatprep.subr.mxu0 0.0
  %1936 = vmatpush1.msra.mxu0 0.0
  %1937 = vmatprep.subr.mxu0 0.0
  %1938 = vmatpush1.msra.mxu0 0.0
  %1939 = vmatprep.subr.mxu0 0.0
  %1940 = vmatpush1.msra.mxu0 0.0
  %1941 = vmatprep.subr.mxu0 0.0
  %1942 = vmatpush1.msra.mxu0 0.0
  %1943 = vmatprep.subr.mxu0 0.0
  %1944 = vmatpush1.msra.mxu0 0.0
  %1945 = vmatprep.subr.mxu0 0.0
  %1946 = vmatpush1.msra.mxu0 0.0
  %1947 = vmatprep.subr.mxu0 0.0
  %1948 = vmatpush1.msra.mxu0 0.0
  %1949 = vmatprep.subr.mxu0 0.0
  %1950 = vmatpush1.msra.mxu0 0.0
  %1951 = vmatprep.subr.mxu0 0.0
  %1952 = vmatpush1.msra.mxu0 0.0
  %1953 = vmatprep.subr.mxu0 0.0
  %1954 = vmatpush1.msra.mxu0 0.0
  %1955 = vmatprep.subr.mxu0 0.0
  %1956 = vmatpush1.msra.mxu0 0.0
  %1957 = vmatprep.subr.mxu0 0.0
  %1958 = vmatpush1.msra.mxu0 0.0
  %1959 = vmatprep.subr.mxu0 0.0
  %1960 = vmatpush1.msra.mxu0 0.0
  %1961 = vmatprep.subr.mxu0 0.0
  %1962 = vmatpush1.msra.mxu0 0.0
  %1963 = vmatprep.subr.mxu0 0.0
  %1964 = vmatpush1.msra.mxu0 0.0
  %1965 = vmatprep.subr.mxu0 0.0
  %1966 = vmatpush1.msra.mxu0 0.0
  %1967 = vmatprep.subr.mxu0 0.0
  %1968 = vmatpush1.msra.mxu0 0.0
  %1969 = vmatprep.subr.mxu0 0.0
  %1970 = vmatpush1.msra.mxu0 0.0
  %1971 = vmatprep.subr.mxu0 0.0
  %1972 = vmatpush1.msra.mxu0 0.0
  %1973 = vmatprep.subr.mxu0 0.0
  %1974 = vmatpush1.msra.mxu0 0.0
  %1975 = vmatprep.mubr.f32.mxu0 0.0
  %1976 = vmatmul.mubr.f32.gmra.mrb[0].mxu0 %v1906
  %v1977 = vpop.f32.mrb[0].mxu0
  %v1978 = vadd.f32 0.0, %v1977
  %v1979 = vpop.f32.mrb[0].mxu0
  %1980 = vmatprep.mubr.f32.mxu0 0.0
  %1981 = vmatmul.mubr.f32.gmra.mrb[0].mxu0 %v1909
  %v1982 = vpop.f32.mrb[0].mxu0
  %v1983 = vadd.f32 0.0, %v1982
  %v1984 = vpop.f32.mrb[0].mxu0
  %1985 = vdwg.mxu0
  %v1987 = vsel %vm347, %v1692, 0
  %v1990 = vsel %vm347, %v1697, 0
  %1992 = vmatprep.subr.mxu0 0.0
  %1993 = vmatpush1.msra.mxu0 %v1700
  %1994 = vmatprep.subr.mxu0 0.0
  %1995 = vmatpush1.msra.mxu0 %v1701
  %1996 = vmatprep.subr.mxu0 0.0
  %1997 = vmatpush1.msra.mxu0 0.0
  %1998 = vmatprep.subr.mxu0 0.0
  %1999 = vmatpush1.msra.mxu0 0.0
  %2000 = vmatprep.subr.mxu0 0.0
  %2001 = vmatpush1.msra.mxu0 0.0
  %2002 = vmatprep.subr.mxu0 0.0
  %2003 = vmatpush1.msra.mxu0 0.0
  %2004 = vmatprep.subr.mxu0 0.0
  %2005 = vmatpush1.msra.mxu0 0.0
  %2006 = vmatprep.subr.mxu0 0.0
  %2007 = vmatpush1.msra.mxu0 0.0
  %2008 = vmatprep.subr.mxu0 0.0
  %2009 = vmatpush1.msra.mxu0 0.0
  %2010 = vmatprep.subr.mxu0 0.0
  %2011 = vmatpush1.msra.mxu0 0.0
  %2012 = vmatprep.subr.mxu0 0.0
  %2013 = vmatpush1.msra.mxu0 0.0
  %2014 = vmatprep.subr.mxu0 0.0
  %2015 = vmatpush1.msra.mxu0 0.0
  %2016 = vmatprep.subr.mxu0 0.0
  %2017 = vmatpush1.msra.mxu0 0.0
  %2018 = vmatprep.subr.mxu0 0.0
  %2019 = vmatpush1.msra.mxu0 0.0
  %2020 = vmatprep.subr.mxu0 0.0
  %2021 = vmatpush1.msra.mxu0 0.0
  %2022 = vmatprep.subr.mxu0 0.0
  %2023 = vmatpush1.msra.mxu0 0.0
  %2024 = vmatprep.subr.mxu0 0.0
  %2025 = vmatpush1.msra.mxu0 0.0
  %2026 = vmatprep.subr.mxu0 0.0
  %2027 = vmatpush1.msra.mxu0 0.0
  %2028 = vmatprep.subr.mxu0 0.0
  %2029 = vmatpush1.msra.mxu0 0.0
  %2030 = vmatprep.subr.mxu0 0.0
  %2031 = vmatpush1.msra.mxu0 0.0
  %2032 = vmatprep.subr.mxu0 0.0
  %2033 = vmatpush1.msra.mxu0 0.0
  %2034 = vmatprep.subr.mxu0 0.0
  %2035 = vmatpush1.msra.mxu0 0.0
  %2036 = vmatprep.subr.mxu0 0.0
  %2037 = vmatpush1.msra.mxu0 0.0
  %2038 = vmatprep.subr.mxu0 0.0
  %2039 = vmatpush1.msra.mxu0 0.0
  %2040 = vmatprep.subr.mxu0 0.0
  %2041 = vmatpush1.msra.mxu0 0.0
  %2042 = vmatprep.subr.mxu0 0.0
  %2043 = vmatpush1.msra.mxu0 0.0
  %2044 = vmatprep.subr.mxu0 0.0
  %2045 = vmatpush1.msra.mxu0 0.0
  %2046 = vmatprep.subr.mxu0 0.0
  %2047 = vmatpush1.msra.mxu0 0.0
  %2048 = vmatprep.subr.mxu0 0.0
  %2049 = vmatpush1.msra.mxu0 0.0
  %2050 = vmatprep.subr.mxu0 0.0
  %2051 = vmatpush1.msra.mxu0 0.0
  %2052 = vmatprep.subr.mxu0 0.0
  %2053 = vmatpush1.msra.mxu0 0.0
  %2054 = vmatprep.subr.mxu0 0.0
  %2055 = vmatpush1.msra.mxu0 0.0
  %2056 = vmatprep.mubr.f32.mxu0 0.0
  %2057 = vmatmul.mubr.f32.gmra.mrb[0].mxu0 %v1987
  %v2058 = vpop.f32.mrb[0].mxu0
  %v2059 = vadd.f32 %v1978, %v2058
  %v2060 = vpop.f32.mrb[0].mxu0
  %2061 = vmatprep.mubr.f32.mxu0 0.0
  %2062 = vmatmul.mubr.f32.gmra.mrb[0].mxu0 %v1990
  %v2063 = vpop.f32.mrb[0].mxu0
  %v2064 = vadd.f32 %v1983, %v2063
  %v2065 = vpop.f32.mrb[0].mxu0
  %2066 = vdwg.mxu0
  %2067 = vrot.lane.b32.xlu0 %v1502, 96
  %v2068 = vpop.permute.xlu0 %2067
  %2069 = vrot.lane.b32.xlu0 %v1501, 96
  %v2070 = vpop.permute.xlu0 %2069
  %2071 = vrot.lane.b32.xlu0 %v1506, 96
  %v2072 = vpop.permute.xlu0 %2071
  %2073 = vrot.lane.b32.xlu0 %v1505, 96
  %v2074 = vpop.permute.xlu0 %2073
  %v2075 = vsel %vm347, %v2068, 0
  %v2077 = vsel %vm347, %v2070, 0
  %v2079 = vsel %vm347, %v2072, 0
  %v2081 = vsel %vm347, %v2074, 0
  %2083 = vmatprep.subr.mxu0 0.0
  %2084 = vmatpush1.xpose.msra.mxu0 %v2079
  %2085 = vmatprep.subr.mxu0 0.0
  %2086 = vmatpush1.xpose.msra.mxu0 %v2081
  %2087 = vmatprep.subr.mxu0 0.0
  %2088 = vmatpush1.xpose.msra.mxu0 0.0
  %2089 = vmatprep.subr.mxu0 0.0
  %2090 = vmatpush1.xpose.msra.mxu0 0.0
  %2091 = vmatprep.subr.mxu0 0.0
  %2092 = vmatpush1.xpose.msra.mxu0 0.0
  %2093 = vmatprep.subr.mxu0 0.0
  %2094 = vmatpush1.xpose.msra.mxu0 0.0
  %2095 = vmatprep.subr.mxu0 0.0
  %2096 = vmatpush1.xpose.msra.mxu0 0.0
  %2097 = vmatprep.subr.mxu0 0.0
  %2098 = vmatpush1.xpose.msra.mxu0 0.0
  %2099 = vmatprep.subr.mxu0 0.0
  %2100 = vmatpush1.xpose.msra.mxu0 0.0
  %2101 = vmatprep.subr.mxu0 0.0
  %2102 = vmatpush1.xpose.msra.mxu0 0.0
  %2103 = vmatprep.subr.mxu0 0.0
  %2104 = vmatpush1.xpose.msra.mxu0 0.0
  %2105 = vmatprep.subr.mxu0 0.0
  %2106 = vmatpush1.xpose.msra.mxu0 0.0
  %2107 = vmatprep.subr.mxu0 0.0
  %2108 = vmatpush1.xpose.msra.mxu0 0.0
  %2109 = vmatprep.subr.mxu0 0.0
  %2110 = vmatpush1.xpose.msra.mxu0 0.0
  %2111 = vmatprep.subr.mxu0 0.0
  %2112 = vmatpush1.xpose.msra.mxu0 0.0
  %2113 = vmatprep.subr.mxu0 0.0
  %2114 = vmatpush1.xpose.msra.mxu0 0.0
  %2115 = vmatprep.subr.mxu0 0.0
  %2116 = vmatpush1.xpose.msra.mxu0 0.0
  %2117 = vmatprep.subr.mxu0 0.0
  %2118 = vmatpush1.xpose.msra.mxu0 0.0
  %2119 = vmatprep.subr.mxu0 0.0
  %2120 = vmatpush1.xpose.msra.mxu0 0.0
  %2121 = vmatprep.subr.mxu0 0.0
  %2122 = vmatpush1.xpose.msra.mxu0 0.0
  %2123 = vmatprep.subr.mxu0 0.0
  %2124 = vmatpush1.xpose.msra.mxu0 0.0
  %2125 = vmatprep.subr.mxu0 0.0
  %2126 = vmatpush1.xpose.msra.mxu0 0.0
  %2127 = vmatprep.subr.mxu0 0.0
  %2128 = vmatpush1.xpose.msra.mxu0 0.0
  %2129 = vmatprep.subr.mxu0 0.0
  %2130 = vmatpush1.xpose.msra.mxu0 0.0
  %2131 = vmatprep.subr.mxu0 0.0
  %2132 = vmatpush1.xpose.msra.mxu0 0.0
  %2133 = vmatprep.subr.mxu0 0.0
  %2134 = vmatpush1.xpose.msra.mxu0 0.0
  %2135 = vmatprep.subr.mxu0 0.0
  %2136 = vmatpush1.xpose.msra.mxu0 0.0
  %2137 = vmatprep.subr.mxu0 0.0
  %2138 = vmatpush1.xpose.msra.mxu0 0.0
  %2139 = vmatprep.subr.mxu0 0.0
  %2140 = vmatpush1.xpose.msra.mxu0 0.0
  %2141 = vmatprep.subr.mxu0 0.0
  %2142 = vmatpush1.xpose.msra.mxu0 0.0
  %2143 = vmatprep.subr.mxu0 0.0
  %2144 = vmatpush1.xpose.msra.mxu0 0.0
  %2145 = vmatprep.subr.mxu0 0.0
  %2146 = vmatpush1.xpose.msra.mxu0 0.0
  %2147 = vmatprep.mubr.f32.mxu0 0.0
  %2148 = vmatmul.mubr.f32.gmra.mrb[0].mxu0 %v2075
  %v2149 = vpop.f32.mrb[0].mxu0
  %v2150 = vadd.f32 0.0, %v2149
  %v2151 = vpop.f32.mrb[0].mxu0
  %2152 = vmatprep.mubr.f32.mxu0 0.0
  %2153 = vmatmul.mubr.f32.gmra.mrb[0].mxu0 %v2077
  %v2154 = vpop.f32.mrb[0].mxu0
  %v2155 = vadd.f32 0.0, %v2154
  %v2156 = vpop.f32.mrb[0].mxu0
  %2157 = vdwg.mxu0
  %v2158 = vsel %vm435, %v2150, -inf
  %2159 = vmax.xlane.f32.xlu0 %v2158
  %v2160 = vpop.xlane.xlu0 %2159
  %v2161 = vsel %vm439, %v2155, -inf
  %2162 = vmax.xlane.f32.xlu0 %v2161
  %v2163 = vpop.xlane.xlu0 %2162
  %v2164 = vsub.f32 %v2150, %v2160
  %v2165 = vsub.f32 %v2155, %v2163
  %v2166 = vmul.f32 %v2164, 1.442695
  %v2167 = vpow.pop %v2166
  %v2168 = vmul.f32 %v2165, 1.442695
  %v2169 = vpow.pop %v2168
  %v2170 = vsel %vm435, %v2167, 0.0
  %2171 = vadd.xlane.f32.xlu0 %v2170
  %v2172 = vpop.xlane.xlu0 %2171
  %v2173 = vsel %vm439, %v2169, 0.0
  %2174 = vadd.xlane.f32.xlu0 %v2173
  %v2175 = vpop.xlane.xlu0 %2174
  %v2176 = vrcp.pop %v2172
  %v2177 = vmul.f32 %v2167, %v2176
  %v2178 = vrcp.pop %v2175
  %v2179 = vmul.f32 %v2169, %v2178
  %2180 = vrot.lane.b32.xlu0 %v1615, 96
  %v2181 = vpop.permute.xlu0 %2180
  %2182 = vrot.lane.b32.xlu0 %v1614, 96
  %v2183 = vpop.permute.xlu0 %2182
  %v2186 = vsel %vm435, %v2177, 0
  %v2189 = vsel %vm435, %v2179, 0
  %v2191 = vsel %vm465, %v2183, 0
  %2193 = vmatprep.subr.mxu0 0.0
  %2194 = vmatpush1.msra.mxu0 %v2181
  %2195 = vmatprep.subr.mxu0 0.0
  %2196 = vmatpush1.msra.mxu0 %v2191
  %2197 = vmatprep.subr.mxu0 0.0
  %2198 = vmatpush1.msra.mxu0 0.0
  %2199 = vmatprep.subr.mxu0 0.0
  %2200 = vmatpush1.msra.mxu0 0.0
  %2201 = vmatprep.subr.mxu0 0.0
  %2202 = vmatpush1.msra.mxu0 0.0
  %2203 = vmatprep.subr.mxu0 0.0
  %2204 = vmatpush1.msra.mxu0 0.0
  %2205 = vmatprep.subr.mxu0 0.0
  %2206 = vmatpush1.msra.mxu0 0.0
  %2207 = vmatprep.subr.mxu0 0.0
  %2208 = vmatpush1.msra.mxu0 0.0
  %2209 = vmatprep.subr.mxu0 0.0
  %2210 = vmatpush1.msra.mxu0 0.0
  %2211 = vmatprep.subr.mxu0 0.0
  %2212 = vmatpush1.msra.mxu0 0.0
  %2213 = vmatprep.subr.mxu0 0.0
  %2214 = vmatpush1.msra.mxu0 0.0
  %2215 = vmatprep.subr.mxu0 0.0
  %2216 = vmatpush1.msra.mxu0 0.0
  %2217 = vmatprep.subr.mxu0 0.0
  %2218 = vmatpush1.msra.mxu0 0.0
  %2219 = vmatprep.subr.mxu0 0.0
  %2220 = vmatpush1.msra.mxu0 0.0
  %2221 = vmatprep.subr.mxu0 0.0
  %2222 = vmatpush1.msra.mxu0 0.0
  %2223 = vmatprep.subr.mxu0 0.0
  %2224 = vmatpush1.msra.mxu0 0.0
  %2225 = vmatprep.subr.mxu0 0.0
  %2226 = vmatpush1.msra.mxu0 0.0
  %2227 = vmatprep.subr.mxu0 0.0
  %2228 = vmatpush1.msra.mxu0 0.0
  %2229 = vmatprep.subr.mxu0 0.0
  %2230 = vmatpush1.msra.mxu0 0.0
  %2231 = vmatprep.subr.mxu0 0.0
  %2232 = vmatpush1.msra.mxu0 0.0
  %2233 = vmatprep.subr.mxu0 0.0
  %2234 = vmatpush1.msra.mxu0 0.0
  %2235 = vmatprep.subr.mxu0 0.0
  %2236 = vmatpush1.msra.mxu0 0.0
  %2237 = vmatprep.subr.mxu0 0.0
  %2238 = vmatpush1.msra.mxu0 0.0
  %2239 = vmatprep.subr.mxu0 0.0
  %2240 = vmatpush1.msra.mxu0 0.0
  %2241 = vmatprep.subr.mxu0 0.0
  %2242 = vmatpush1.msra.mxu0 0.0
  %2243 = vmatprep.subr.mxu0 0.0
  %2244 = vmatpush1.msra.mxu0 0.0
  %2245 = vmatprep.subr.mxu0 0.0
  %2246 = vmatpush1.msra.mxu0 0.0
  %2247 = vmatprep.subr.mxu0 0.0
  %2248 = vmatpush1.msra.mxu0 0.0
  %2249 = vmatprep.subr.mxu0 0.0
  %2250 = vmatpush1.msra.mxu0 0.0
  %2251 = vmatprep.subr.mxu0 0.0
  %2252 = vmatpush1.msra.mxu0 0.0
  %2253 = vmatprep.subr.mxu0 0.0
  %2254 = vmatpush1.msra.mxu0 0.0
  %2255 = vmatprep.subr.mxu0 0.0
  %2256 = vmatpush1.msra.mxu0 0.0
  %2257 = vmatprep.mubr.f32.mxu0 0.0
  %2258 = vmatmul.mubr.f32.gmra.mrb[0].mxu0 %v2186
  %v2259 = vpop.f32.mrb[0].mxu0
  %v2260 = vadd.f32 0.0, %v2259
  %v2261 = vpop.f32.mrb[0].mxu0
  %2262 = vmatprep.mubr.f32.mxu0 0.0
  %2263 = vmatmul.mubr.f32.gmra.mrb[0].mxu0 %v2189
  %v2264 = vpop.f32.mrb[0].mxu0
  %v2265 = vadd.f32 0.0, %v2264
  %v2266 = vpop.f32.mrb[0].mxu0
  %2267 = vdwg.mxu0
  %v2268 = vld [vmem:[%s1114] sm:$0xff]
  %v2269 = vld [vmem:[%s1114 + $0x8] sm:$0xff]
  %v2271 = vsel %vm347, %v2260, 0
  %v2274 = vsel %vm347, %v2265, 0
  %2276 = vmatprep.subr.mxu0 0.0
  %2277 = vmatpush1.msra.mxu0 %v2268
  %2278 = vmatprep.subr.mxu0 0.0
  %2279 = vmatpush1.msra.mxu0 %v2269
  %2280 = vmatprep.subr.mxu0 0.0
  %2281 = vmatpush1.msra.mxu0 0.0
  %2282 = vmatprep.subr.mxu0 0.0
  %2283 = vmatpush1.msra.mxu0 0.0
  %2284 = vmatprep.subr.mxu0 0.0
  %2285 = vmatpush1.msra.mxu0 0.0
  %2286 = vmatprep.subr.mxu0 0.0
  %2287 = vmatpush1.msra.mxu0 0.0
  %2288 = vmatprep.subr.mxu0 0.0
  %2289 = vmatpush1.msra.mxu0 0.0
  %2290 = vmatprep.subr.mxu0 0.0
  %2291 = vmatpush1.msra.mxu0 0.0
  %2292 = vmatprep.subr.mxu0 0.0
  %2293 = vmatpush1.msra.mxu0 0.0
  %2294 = vmatprep.subr.mxu0 0.0
  %2295 = vmatpush1.msra.mxu0 0.0
  %2296 = vmatprep.subr.mxu0 0.0
  %2297 = vmatpush1.msra.mxu0 0.0
  %2298 = vmatprep.subr.mxu0 0.0
  %2299 = vmatpush1.msra.mxu0 0.0
  %2300 = vmatprep.subr.mxu0 0.0
  %2301 = vmatpush1.msra.mxu0 0.0
  %2302 = vmatprep.subr.mxu0 0.0
  %2303 = vmatpush1.msra.mxu0 0.0
  %2304 = vmatprep.subr.mxu0 0.0
  %2305 = vmatpush1.msra.mxu0 0.0
  %2306 = vmatprep.subr.mxu0 0.0
  %2307 = vmatpush1.msra.mxu0 0.0
  %2308 = vmatprep.subr.mxu0 0.0
  %2309 = vmatpush1.msra.mxu0 0.0
  %2310 = vmatprep.subr.mxu0 0.0
  %2311 = vmatpush1.msra.mxu0 0.0
  %2312 = vmatprep.subr.mxu0 0.0
  %2313 = vmatpush1.msra.mxu0 0.0
  %2314 = vmatprep.subr.mxu0 0.0
  %2315 = vmatpush1.msra.mxu0 0.0
  %2316 = vmatprep.subr.mxu0 0.0
  %2317 = vmatpush1.msra.mxu0 0.0
  %2318 = vmatprep.subr.mxu0 0.0
  %2319 = vmatpush1.msra.mxu0 0.0
  %2320 = vmatprep.subr.mxu0 0.0
  %2321 = vmatpush1.msra.mxu0 0.0
  %2322 = vmatprep.subr.mxu0 0.0
  %2323 = vmatpush1.msra.mxu0 0.0
  %2324 = vmatprep.subr.mxu0 0.0
  %2325 = vmatpush1.msra.mxu0 0.0
  %2326 = vmatprep.subr.mxu0 0.0
  %2327 = vmatpush1.msra.mxu0 0.0
  %2328 = vmatprep.subr.mxu0 0.0
  %2329 = vmatpush1.msra.mxu0 0.0
  %2330 = vmatprep.subr.mxu0 0.0
  %2331 = vmatpush1.msra.mxu0 0.0
  %2332 = vmatprep.subr.mxu0 0.0
  %2333 = vmatpush1.msra.mxu0 0.0
  %2334 = vmatprep.subr.mxu0 0.0
  %2335 = vmatpush1.msra.mxu0 0.0
  %2336 = vmatprep.subr.mxu0 0.0
  %2337 = vmatpush1.msra.mxu0 0.0
  %2338 = vmatprep.subr.mxu0 0.0
  %2339 = vmatpush1.msra.mxu0 0.0
  %2340 = vmatprep.mubr.f32.mxu0 0.0
  %2341 = vmatmul.mubr.f32.gmra.mrb[0].mxu0 %v2271
  %v2342 = vpop.f32.mrb[0].mxu0
  %v2343 = vadd.f32 0.0, %v2342
  %v2344 = vpop.f32.mrb[0].mxu0
  %2345 = vmatprep.mubr.f32.mxu0 0.0
  %2346 = vmatmul.mubr.f32.gmra.mrb[0].mxu0 %v2274
  %v2347 = vpop.f32.mrb[0].mxu0
  %v2348 = vadd.f32 0.0, %v2347
  %v2349 = vpop.f32.mrb[0].mxu0
  %2350 = vdwg.mxu0
  %v2351 = vadd.f32 %v2059, %v2343
  %v2352 = vadd.f32 %v2064, %v2348
  %2353 = vrot.lane.b32.xlu0 %v1502, 80
  %v2354 = vpop.permute.xlu0 %2353
  %2355 = vrot.lane.b32.xlu0 %v1501, 80
  %v2356 = vpop.permute.xlu0 %2355
  %2357 = vrot.lane.b32.xlu0 %v1506, 80
  %v2358 = vpop.permute.xlu0 %2357
  %2359 = vrot.lane.b32.xlu0 %v1505, 80
  %v2360 = vpop.permute.xlu0 %2359
  %v2361 = vsel %vm347, %v2354, 0
  %v2363 = vsel %vm347, %v2356, 0
  %v2365 = vsel %vm347, %v2358, 0
  %v2367 = vsel %vm347, %v2360, 0
  %2369 = vmatprep.subr.mxu0 0.0
  %2370 = vmatpush1.xpose.msra.mxu0 %v2365
  %2371 = vmatprep.subr.mxu0 0.0
  %2372 = vmatpush1.xpose.msra.mxu0 %v2367
  %2373 = vmatprep.subr.mxu0 0.0
  %2374 = vmatpush1.xpose.msra.mxu0 0.0
  %2375 = vmatprep.subr.mxu0 0.0
  %2376 = vmatpush1.xpose.msra.mxu0 0.0
  %2377 = vmatprep.subr.mxu0 0.0
  %2378 = vmatpush1.xpose.msra.mxu0 0.0
  %2379 = vmatprep.subr.mxu0 0.0
  %2380 = vmatpush1.xpose.msra.mxu0 0.0
  %2381 = vmatprep.subr.mxu0 0.0
  %2382 = vmatpush1.xpose.msra.mxu0 0.0
  %2383 = vmatprep.subr.mxu0 0.0
  %2384 = vmatpush1.xpose.msra.mxu0 0.0
  %2385 = vmatprep.subr.mxu0 0.0
  %2386 = vmatpush1.xpose.msra.mxu0 0.0
  %2387 = vmatprep.subr.mxu0 0.0
  %2388 = vmatpush1.xpose.msra.mxu0 0.0
  %2389 = vmatprep.subr.mxu0 0.0
  %2390 = vmatpush1.xpose.msra.mxu0 0.0
  %2391 = vmatprep.subr.mxu0 0.0
  %2392 = vmatpush1.xpose.msra.mxu0 0.0
  %2393 = vmatprep.subr.mxu0 0.0
  %2394 = vmatpush1.xpose.msra.mxu0 0.0
  %2395 = vmatprep.subr.mxu0 0.0
  %2396 = vmatpush1.xpose.msra.mxu0 0.0
  %2397 = vmatprep.subr.mxu0 0.0
  %2398 = vmatpush1.xpose.msra.mxu0 0.0
  %2399 = vmatprep.subr.mxu0 0.0
  %2400 = vmatpush1.xpose.msra.mxu0 0.0
  %2401 = vmatprep.subr.mxu0 0.0
  %2402 = vmatpush1.xpose.msra.mxu0 0.0
  %2403 = vmatprep.subr.mxu0 0.0
  %2404 = vmatpush1.xpose.msra.mxu0 0.0
  %2405 = vmatprep.subr.mxu0 0.0
  %2406 = vmatpush1.xpose.msra.mxu0 0.0
  %2407 = vmatprep.subr.mxu0 0.0
  %2408 = vmatpush1.xpose.msra.mxu0 0.0
  %2409 = vmatprep.subr.mxu0 0.0
  %2410 = vmatpush1.xpose.msra.mxu0 0.0
  %2411 = vmatprep.subr.mxu0 0.0
  %2412 = vmatpush1.xpose.msra.mxu0 0.0
  %2413 = vmatprep.subr.mxu0 0.0
  %2414 = vmatpush1.xpose.msra.mxu0 0.0
  %2415 = vmatprep.subr.mxu0 0.0
  %2416 = vmatpush1.xpose.msra.mxu0 0.0
  %2417 = vmatprep.subr.mxu0 0.0
  %2418 = vmatpush1.xpose.msra.mxu0 0.0
  %2419 = vmatprep.subr.mxu0 0.0
  %2420 = vmatpush1.xpose.msra.mxu0 0.0
  %2421 = vmatprep.subr.mxu0 0.0
  %2422 = vmatpush1.xpose.msra.mxu0 0.0
  %2423 = vmatprep.subr.mxu0 0.0
  %2424 = vmatpush1.xpose.msra.mxu0 0.0
  %2425 = vmatprep.subr.mxu0 0.0
  %2426 = vmatpush1.xpose.msra.mxu0 0.0
  %2427 = vmatprep.subr.mxu0 0.0
  %2428 = vmatpush1.xpose.msra.mxu0 0.0
  %2429 = vmatprep.subr.mxu0 0.0
  %2430 = vmatpush1.xpose.msra.mxu0 0.0
  %2431 = vmatprep.subr.mxu0 0.0
  %2432 = vmatpush1.xpose.msra.mxu0 0.0
  %2433 = vmatprep.mubr.f32.mxu0 0.0
  %2434 = vmatmul.mubr.f32.gmra.mrb[0].mxu0 %v2361
  %v2435 = vpop.f32.mrb[0].mxu0
  %v2436 = vadd.f32 0.0, %v2435
  %v2437 = vpop.f32.mrb[0].mxu0
  %2438 = vmatprep.mubr.f32.mxu0 0.0
  %2439 = vmatmul.mubr.f32.gmra.mrb[0].mxu0 %v2363
  %v2440 = vpop.f32.mrb[0].mxu0
  %v2441 = vadd.f32 0.0, %v2440
  %v2442 = vpop.f32.mrb[0].mxu0
  %2443 = vdwg.mxu0
  %v2444 = vsel %vm435, %v2436, -inf
  %2445 = vmax.xlane.f32.xlu0 %v2444
  %v2446 = vpop.xlane.xlu0 %2445
  %v2447 = vsel %vm439, %v2441, -inf
  %2448 = vmax.xlane.f32.xlu0 %v2447
  %v2449 = vpop.xlane.xlu0 %2448
  %v2450 = vsub.f32 %v2436, %v2446
  %v2451 = vsub.f32 %v2441, %v2449
  %v2452 = vmul.f32 %v2450, 1.442695
  %v2453 = vpow.pop %v2452
  %v2454 = vmul.f32 %v2451, 1.442695
  %v2455 = vpow.pop %v2454
  %v2456 = vsel %vm435, %v2453, 0.0
  %2457 = vadd.xlane.f32.xlu0 %v2456
  %v2458 = vpop.xlane.xlu0 %2457
  %v2459 = vsel %vm439, %v2455, 0.0
  %2460 = vadd.xlane.f32.xlu0 %v2459
  %v2461 = vpop.xlane.xlu0 %2460
  %v2462 = vrcp.pop %v2458
  %v2463 = vmul.f32 %v2453, %v2462
  %v2464 = vrcp.pop %v2461
  %v2465 = vmul.f32 %v2455, %v2464
  %2466 = vrot.lane.b32.xlu0 %v1615, 80
  %v2467 = vpop.permute.xlu0 %2466
  %2468 = vrot.lane.b32.xlu0 %v1614, 80
  %v2469 = vpop.permute.xlu0 %2468
  %v2472 = vsel %vm435, %v2463, 0
  %v2475 = vsel %vm435, %v2465, 0
  %v2477 = vsel %vm465, %v2469, 0
  %2479 = vmatprep.subr.mxu0 0.0
  %2480 = vmatpush1.msra.mxu0 %v2467
  %2481 = vmatprep.subr.mxu0 0.0
  %2482 = vmatpush1.msra.mxu0 %v2477
  %2483 = vmatprep.subr.mxu0 0.0
  %2484 = vmatpush1.msra.mxu0 0.0
  %2485 = vmatprep.subr.mxu0 0.0
  %2486 = vmatpush1.msra.mxu0 0.0
  %2487 = vmatprep.subr.mxu0 0.0
  %2488 = vmatpush1.msra.mxu0 0.0
  %2489 = vmatprep.subr.mxu0 0.0
  %2490 = vmatpush1.msra.mxu0 0.0
  %2491 = vmatprep.subr.mxu0 0.0
  %2492 = vmatpush1.msra.mxu0 0.0
  %2493 = vmatprep.subr.mxu0 0.0
  %2494 = vmatpush1.msra.mxu0 0.0
  %2495 = vmatprep.subr.mxu0 0.0
  %2496 = vmatpush1.msra.mxu0 0.0
  %2497 = vmatprep.subr.mxu0 0.0
  %2498 = vmatpush1.msra.mxu0 0.0
  %2499 = vmatprep.subr.mxu0 0.0
  %2500 = vmatpush1.msra.mxu0 0.0
  %2501 = vmatprep.subr.mxu0 0.0
  %2502 = vmatpush1.msra.mxu0 0.0
  %2503 = vmatprep.subr.mxu0 0.0
  %2504 = vmatpush1.msra.mxu0 0.0
  %2505 = vmatprep.subr.mxu0 0.0
  %2506 = vmatpush1.msra.mxu0 0.0
  %2507 = vmatprep.subr.mxu0 0.0
  %2508 = vmatpush1.msra.mxu0 0.0
  %2509 = vmatprep.subr.mxu0 0.0
  %2510 = vmatpush1.msra.mxu0 0.0
  %2511 = vmatprep.subr.mxu0 0.0
  %2512 = vmatpush1.msra.mxu0 0.0
  %2513 = vmatprep.subr.mxu0 0.0
  %2514 = vmatpush1.msra.mxu0 0.0
  %2515 = vmatprep.subr.mxu0 0.0
  %2516 = vmatpush1.msra.mxu0 0.0
  %2517 = vmatprep.subr.mxu0 0.0
  %2518 = vmatpush1.msra.mxu0 0.0
  %2519 = vmatprep.subr.mxu0 0.0
  %2520 = vmatpush1.msra.mxu0 0.0
  %2521 = vmatprep.subr.mxu0 0.0
  %2522 = vmatpush1.msra.mxu0 0.0
  %2523 = vmatprep.subr.mxu0 0.0
  %2524 = vmatpush1.msra.mxu0 0.0
  %2525 = vmatprep.subr.mxu0 0.0
  %2526 = vmatpush1.msra.mxu0 0.0
  %2527 = vmatprep.subr.mxu0 0.0
  %2528 = vmatpush1.msra.mxu0 0.0
  %2529 = vmatprep.subr.mxu0 0.0
  %2530 = vmatpush1.msra.mxu0 0.0
  %2531 = vmatprep.subr.mxu0 0.0
  %2532 = vmatpush1.msra.mxu0 0.0
  %2533 = vmatprep.subr.mxu0 0.0
  %2534 = vmatpush1.msra.mxu0 0.0
  %2535 = vmatprep.subr.mxu0 0.0
  %2536 = vmatpush1.msra.mxu0 0.0
  %2537 = vmatprep.subr.mxu0 0.0
  %2538 = vmatpush1.msra.mxu0 0.0
  %2539 = vmatprep.subr.mxu0 0.0
  %2540 = vmatpush1.msra.mxu0 0.0
  %2541 = vmatprep.subr.mxu0 0.0
  %2542 = vmatpush1.msra.mxu0 0.0
  %2543 = vmatprep.mubr.f32.mxu0 0.0
  %2544 = vmatmul.mubr.f32.gmra.mrb[0].mxu0 %v2472
  %v2545 = vpop.f32.mrb[0].mxu0
  %v2546 = vadd.f32 0.0, %v2545
  %v2547 = vpop.f32.mrb[0].mxu0
  %2548 = vmatprep.mubr.f32.mxu0 0.0
  %2549 = vmatmul.mubr.f32.gmra.mrb[0].mxu0 %v2475
  %v2550 = vpop.f32.mrb[0].mxu0
  %v2551 = vadd.f32 0.0, %v2550
  %v2552 = vpop.f32.mrb[0].mxu0
  %2553 = vdwg.mxu0
  %v2554 = vld [vmem:[%s1401] sm:$0xff]
  %v2555 = vld [vmem:[%s1401 + $0x8] sm:$0xff]
  %v2557 = vsel %vm347, %v2546, 0
  %v2560 = vsel %vm347, %v2551, 0
  %2562 = vmatprep.subr.mxu0 0.0
  %2563 = vmatpush1.msra.mxu0 %v2554
  %2564 = vmatprep.subr.mxu0 0.0
  %2565 = vmatpush1.msra.mxu0 %v2555
  %2566 = vmatprep.subr.mxu0 0.0
  %2567 = vmatpush1.msra.mxu0 0.0
  %2568 = vmatprep.subr.mxu0 0.0
  %2569 = vmatpush1.msra.mxu0 0.0
  %2570 = vmatprep.subr.mxu0 0.0
  %2571 = vmatpush1.msra.mxu0 0.0
  %2572 = vmatprep.subr.mxu0 0.0
  %2573 = vmatpush1.msra.mxu0 0.0
  %2574 = vmatprep.subr.mxu0 0.0
  %2575 = vmatpush1.msra.mxu0 0.0
  %2576 = vmatprep.subr.mxu0 0.0
  %2577 = vmatpush1.msra.mxu0 0.0
  %2578 = vmatprep.subr.mxu0 0.0
  %2579 = vmatpush1.msra.mxu0 0.0
  %2580 = vmatprep.subr.mxu0 0.0
  %2581 = vmatpush1.msra.mxu0 0.0
  %2582 = vmatprep.subr.mxu0 0.0
  %2583 = vmatpush1.msra.mxu0 0.0
  %2584 = vmatprep.subr.mxu0 0.0
  %2585 = vmatpush1.msra.mxu0 0.0
  %2586 = vmatprep.subr.mxu0 0.0
  %2587 = vmatpush1.msra.mxu0 0.0
  %2588 = vmatprep.subr.mxu0 0.0
  %2589 = vmatpush1.msra.mxu0 0.0
  %2590 = vmatprep.subr.mxu0 0.0
  %2591 = vmatpush1.msra.mxu0 0.0
  %2592 = vmatprep.subr.mxu0 0.0
  %2593 = vmatpush1.msra.mxu0 0.0
  %2594 = vmatprep.subr.mxu0 0.0
  %2595 = vmatpush1.msra.mxu0 0.0
  %2596 = vmatprep.subr.mxu0 0.0
  %2597 = vmatpush1.msra.mxu0 0.0
  %2598 = vmatprep.subr.mxu0 0.0
  %2599 = vmatpush1.msra.mxu0 0.0
  %2600 = vmatprep.subr.mxu0 0.0
  %2601 = vmatpush1.msra.mxu0 0.0
  %2602 = vmatprep.subr.mxu0 0.0
  %2603 = vmatpush1.msra.mxu0 0.0
  %2604 = vmatprep.subr.mxu0 0.0
  %2605 = vmatpush1.msra.mxu0 0.0
  %2606 = vmatprep.subr.mxu0 0.0
  %2607 = vmatpush1.msra.mxu0 0.0
  %2608 = vmatprep.subr.mxu0 0.0
  %2609 = vmatpush1.msra.mxu0 0.0
  %2610 = vmatprep.subr.mxu0 0.0
  %2611 = vmatpush1.msra.mxu0 0.0
  %2612 = vmatprep.subr.mxu0 0.0
  %2613 = vmatpush1.msra.mxu0 0.0
  %2614 = vmatprep.subr.mxu0 0.0
  %2615 = vmatpush1.msra.mxu0 0.0
  %2616 = vmatprep.subr.mxu0 0.0
  %2617 = vmatpush1.msra.mxu0 0.0
  %2618 = vmatprep.subr.mxu0 0.0
  %2619 = vmatpush1.msra.mxu0 0.0
  %2620 = vmatprep.subr.mxu0 0.0
  %2621 = vmatpush1.msra.mxu0 0.0
  %2622 = vmatprep.subr.mxu0 0.0
  %2623 = vmatpush1.msra.mxu0 0.0
  %2624 = vmatprep.subr.mxu0 0.0
  %2625 = vmatpush1.msra.mxu0 0.0
  %2626 = vmatprep.mubr.f32.mxu0 0.0
  %2627 = vmatmul.mubr.f32.gmra.mrb[0].mxu0 %v2557
  %v2628 = vpop.f32.mrb[0].mxu0
  %v2629 = vadd.f32 0.0, %v2628
  %v2630 = vpop.f32.mrb[0].mxu0
  %2631 = vmatprep.mubr.f32.mxu0 0.0
  %2632 = vmatmul.mubr.f32.gmra.mrb[0].mxu0 %v2560
  %v2633 = vpop.f32.mrb[0].mxu0
  %v2634 = vadd.f32 0.0, %v2633
  %v2635 = vpop.f32.mrb[0].mxu0
  %2636 = vdwg.mxu0
  %v2637 = vadd.f32 %v2351, %v2629
  %v2638 = vadd.f32 %v2352, %v2634
  %v2639 = vadd.f32 %v2637, %v1491
  %v2640 = vadd.f32 %v2638, %v1491
  %s2641 = scalar_lea.vmem %s4, 16
  %2642 = vst.msk [vmem:[%s2641] sm:$0xff] %vm35, %v2639
  %2643 = vst.msk [vmem:[%s2641 + $0x8] sm:$0x3] %vm1496, %v2640
  // Predicated region
  $region18: #{multihead_attention.1} parent=0 // pred_check
    _
  $region19: #{multihead_attention.1} parent=0 // pred_check_branch
    %2645 = sbr.rel (0) target = $region21
  $region20: #{multihead_attention.1} parent=0 // pred_region
    _
  $region21: #{multihead_attention.1} parent=0 // pred_fallthru
    _
  // Predicated region
  $region22: #{multihead_attention.1} parent=0 // pred_check
    _
  $region23: #{multihead_attention.1} parent=0 // pred_check_branch
    %2647 = sbr.rel (0) target = $region25
  $region24: #{multihead_attention.1} parent=0 // pred_region
    _
  $region25: #{multihead_attention.1} parent=0 // pred_fallthru
    _

</llo_original>
